<compile_context>
chip_gen: v7x
topology: tpu7x:2x2x1
jax: 0.10.0
libtpu: 0.0.40
codegen_flags: <defaults>
</compile_context>

<pallas_src>
import jax
import jax.numpy as jnp
from jax.experimental import pallas as pl
from jax.experimental.pallas import tpu as pltpu

# ---------------- logical sizes (from the module __init__) -------------------
D_IN = 10            # raw observation features (TaskEncoder input_dim)
D_FEAT = 10          # adaptive features width (lanes 0..9)
D_MEM = 16           # task context width (TaskEncoder latent_dim, lanes 16..31)
MEM_OFF = 16         # lane offset of the memory features
N_EXPERTS = 4        # MoE experts (gate logits at head lanes 0..3)
D_HID = 128          # MoE hidden_dim
N_ALGOS = 3          # adaptive RL selector candidate algorithms
N_ACTIONS = 4        # discrete action head (act logits at head lanes 4..7)

PAD = 128                             # lane padding of every feature axis
PRUNE_SHIFT = PAD // 2                # 64: direction-agnostic rotation amount
PRUNE_OFF = MEM_OFF + PRUNE_SHIFT     # 80: prune-gate columns 80..95
SEL_COL = 16                          # selector logits at head cols 16..18
META_COL = 24                         # meta-learning head at head col 24
N_CHAIN = 8                           # stacked 128x128 chain matrices
W_BIG_COLS = PAD * (1 + N_EXPERTS)    # 640: [head 128 | 4 expert h1 blocks]
B = 8                                 # batch


# ------------------------------- kernel --------------------------------------
def world_model_kernel(x_ref, wc_ref, wbig_ref, w2_ref, b_ref, bbig_ref,
                       policy_ref, action_ref, xpad_ref):
    f32 = jnp.float32

    def dot(a, w):
        # bf16 x bf16 on the MXU, f32 accumulation.  Each activation feeds
        # exactly one matmul, so this casts every value at most once.
        return jnp.dot(a.astype(jnp.bfloat16), w, preferred_element_type=f32)

    def brow(i):
        return b_ref[i:i + 1, :]                      # [1, 128] f32

    def softmax(logits):
        m = jnp.max(logits, axis=-1, keepdims=True)
        e = jnp.exp(logits - m)
        return e * pl.reciprocal(jnp.sum(e, axis=-1, keepdims=True), approx=True)

    # ---- pad raw obs (B,10) to a 128-lane vector inside the kernel ----------
    xpad_ref[...] = jnp.zeros_like(xpad_ref)
    xpad_ref[:, :D_IN] = x_ref[...]
    x = xpad_ref[...]                                 # [B, 128]

    lane = jax.lax.broadcasted_iota(jnp.int32, (x.shape[0], PAD), 1)

    # --- NeuroSymbolicAI: process_input + apply_gnn (mean node aggregation) ---
    # TODO(synk): the GNN aggregation here averages across the batch axis; if
    # the reference aggregates nodes *within* a sample, drop the mean (that
    # would also unlock batch-sharding across cores).
    sym = jax.nn.relu(dot(x, wc_ref[0]) + brow(0))
    agg = jnp.mean(sym, axis=0, keepdims=True)
    struct = jax.nn.relu(dot(sym + agg, wc_ref[1]) + brow(1))

    # --- LiquidNeuralNetwork: process / LSM / enhanced reservoir -------------
    h = jnp.tanh(dot(struct, wc_ref[2]) + brow(2))
    h = jnp.tanh(dot(h, wc_ref[3]) + brow(3))
    h = jnp.tanh(dot(h, wc_ref[4]) + brow(4))         # adaptive_features, lanes 0..9

    # --- SmallMemoryModel: fused retrieve (cols 16..31) + prune gate (80..95) -
    z = dot(h, wc_ref[5]) + brow(5)
    mem_mask = jnp.logical_and(lane >= MEM_OFF, lane < MEM_OFF + D_MEM)
    mem = jnp.where(mem_mask, jax.nn.relu(z), 0.0)             # retrieve_memory
    # rotate by exactly PAD/2 so cols 80..95 land on lanes 16..31 regardless
    # of the rotation direction convention.
    prune = pltpu.roll(jax.nn.sigmoid(z), shift=PRUNE_SHIFT, axis=1)
    mem = mem + jnp.tanh(dot(mem, wc_ref[6]) + brow(6))        # contrastive optim
    mem = mem * prune                                          # dynamic pruning
    mem = mem * jax.nn.sigmoid(dot(mem, wc_ref[7]) + brow(7))  # RL prioritization

    # --- MetaRL: gate | action head | selector | meta | 4 expert h1 ----------
    combined = h + mem                    # disjoint lanes == logical concat (26 dims)
    z1 = dot(combined, wbig_ref[...]) + bbig_ref[...]          # [B, 640]
    head = z1[:, :PAD]                    # gate 0..3, act 4..7, sel 16..18, meta 24
    h1 = jax.nn.relu(z1[:, PAD:])         # [B, 4*128] stacked expert hiddens
    out_all = dot(h1, w2_ref[...]) + brow(8)    # expert e's scalar lands in lane e

    gate = softmax(jnp.where(lane < N_EXPERTS, head, -1e30))
    policy = jnp.sum(gate * out_all, axis=-1, keepdims=True)   # [B, 1] MoE output

    # --- AdaptiveRLSelector (folded into the head block) ---------------------
    sel_mask = jnp.logical_and(lane >= SEL_COL, lane < SEL_COL + N_ALGOS)
    sel = softmax(jnp.where(sel_mask, head, -1e30))
    coef = jnp.where(sel_mask, 0.5 * (lane - SEL_COL + 1).astype(f32), 0.0)
    scale = jnp.sum(sel * coef, axis=-1, keepdims=True)        # select_best_algorithm
    meta = jnp.sum(jnp.where(lane == META_COL, jnp.tanh(head), 0.0),
                   axis=-1, keepdims=True)                     # meta strategy
    policy = policy * scale + meta
    policy_ref[...] = policy

    # --- in-kernel action argmax over act-logit lanes 4..7 -------------------
    act_mask = jnp.logical_and(lane >= N_EXPERTS, lane < N_EXPERTS + N_ACTIONS)
    act_logits = jnp.where(act_mask, head, -1e30)
    best = jnp.max(act_logits, axis=-1, keepdims=True)
    idx = jnp.min(jnp.where(jnp.logical_and(act_mask, act_logits >= best), lane, PAD),
                  axis=-1, keepdims=True) - N_EXPERTS          # first-max lane
    action_ref[...] = idx.astype(jnp.int32)


# ----------------------------- parameter setup -------------------------------
def make_params(seed=0):
    keys = iter(jax.random.split(jax.random.PRNGKey(seed), 64))

    def nrm(shape, scale=0.1):
        return scale * jax.random.normal(next(keys), shape, jnp.float32)

    w_chain = jnp.zeros((N_CHAIN, PAD, PAD), jnp.float32)
    b_all = jnp.zeros((N_CHAIN + 1, PAD), jnp.float32)

    # 0..4: NSAI (sym, gnn) + LNN (lnn, lsm, res): lanes 0..9 -> lanes 0..9
    for i in range(5):
        w_chain = w_chain.at[i, :D_FEAT, :D_FEAT].set(nrm((D_FEAT, D_FEAT)))
        b_all = b_all.at[i, :D_FEAT].set(nrm((D_FEAT,), scale=0.05))

    # 5: fused SMM retrieve (h -> mem lanes 16..31) + pruning gate (-> 80..95)
    w_chain = w_chain.at[5, :D_FEAT, MEM_OFF:MEM_OFF + D_MEM].set(nrm((D_FEAT, D_MEM)))
    b_all = b_all.at[5, MEM_OFF:MEM_OFF + D_MEM].set(nrm((D_MEM,), scale=0.05))
    w_chain = w_chain.at[5, :D_FEAT, PRUNE_OFF:PRUNE_OFF + D_MEM].set(nrm((D_FEAT, D_MEM)))
    b_all = b_all.at[5, PRUNE_OFF:PRUNE_OFF + D_MEM].set(nrm((D_MEM,), scale=0.05))

    # 6: contrastive, 7: prioritization: mem -> mem
    for i in (6, 7):
        w_chain = w_chain.at[i, MEM_OFF:MEM_OFF + D_MEM,
                             MEM_OFF:MEM_OFF + D_MEM].set(nrm((D_MEM, D_MEM)))
        b_all = b_all.at[i, MEM_OFF:MEM_OFF + D_MEM].set(nrm((D_MEM,), scale=0.05))

    # fused "big" matmul: combined (h|mem) ->
    #   head block (128 cols): gate 0..3 | act 4..7 | selector 16..18 | meta 24
    #   + 4 expert hidden blocks of 128 cols each.
    w_big = jnp.zeros((PAD, W_BIG_COLS), jnp.float32)
    b_big = jnp.zeros((1, W_BIG_COLS), jnp.float32)
    # MoE gate (no bias)
    w_big = w_big.at[:D_FEAT, :N_EXPERTS].set(nrm((D_FEAT, N_EXPERTS)))
    w_big = w_big.at[MEM_OFF:MEM_OFF + D_MEM, :N_EXPERTS].set(nrm((D_MEM, N_EXPERTS)))
    # action head
    # TODO(synk): nn.TransformerEncoder(d_model=26, nhead=4) is invalid in PyTorch
    # (26 % 4 != 0); the exploration policy is replaced by a linear action head.
    w_big = w_big.at[:D_FEAT, N_EXPERTS:N_EXPERTS + N_ACTIONS].set(nrm((D_FEAT, N_ACTIONS)))
    w_big = w_big.at[MEM_OFF:MEM_OFF + D_MEM,
                     N_EXPERTS:N_EXPERTS + N_ACTIONS].set(nrm((D_MEM, N_ACTIONS)))
    # AdaptiveRLSelector folded in: selector logits (cols 16..18) + meta (col 24)
    w_big = w_big.at[MEM_OFF:MEM_OFF + D_MEM, SEL_COL:SEL_COL + N_ALGOS].set(nrm((D_MEM, N_ALGOS)))
    w_big = w_big.at[MEM_OFF:MEM_OFF + D_MEM, META_COL:META_COL + 1].set(nrm((D_MEM, 1)))
    b_big = b_big.at[0, META_COL].set(0.05 * jax.random.normal(next(keys), (), jnp.float32))

    # experts: layer-1 columns packed into w_big, layer-2 block-diagonal in w2_all
    w2_all = jnp.zeros((N_EXPERTS * D_HID, PAD), jnp.float32)
    for e in range(N_EXPERTS):
        c0 = PAD * (e + 1)
        w_big = w_big.at[:D_FEAT, c0:c0 + D_HID].set(nrm((D_FEAT, D_HID)))
        w_big = w_big.at[MEM_OFF:MEM_OFF + D_MEM, c0:c0 + D_HID].set(nrm((D_MEM, D_HID)))
        b_big = b_big.at[0, c0:c0 + D_HID].set(nrm((D_HID,), scale=0.05))
        w2_all = w2_all.at[e * D_HID:(e + 1) * D_HID, e].set(nrm((D_HID,)))
        b_all = b_all.at[N_CHAIN, e].set(0.05 * jax.random.normal(next(keys), (), jnp.float32))

    return {
        "w_chain": w_chain.astype(jnp.bfloat16),   # [8, 128, 128]
        "w_big": w_big.astype(jnp.bfloat16),       # [128, 640]
        "w2_all": w2_all.astype(jnp.bfloat16),     # [512, 128]
        "b_all": b_all,                            # [9, 128] f32
        "b_big": b_big,                            # [1, 640] f32
    }


# ------------------------------- wrapper --------------------------------------
@jax.jit
def world_model_rl(x, params):
    """x: [B, D_IN] float32 -> (policy_output [B, 1] f32, action [B] int32)."""
    batch = x.shape[0]
    x_f32 = x.astype(jnp.float32)

    flops = 2 * batch * (N_CHAIN * PAD * PAD + PAD * W_BIG_COLS + N_EXPERTS * D_HID * PAD)
    transcendentals = 10 * batch * PAD
    bytes_accessed = int(
        x_f32.size * x_f32.dtype.itemsize
        + sum(int(v.size) * v.dtype.itemsize for v in params.values())
        + batch * 8)

    vmem = pl.BlockSpec(memory_space=pltpu.MemorySpace.VMEM)
    policy_output, action = pl.pallas_call(
        world_model_kernel,
        out_shape=(jax.ShapeDtypeStruct((batch, 1), jnp.float32),
                   jax.ShapeDtypeStruct((batch, 1), jnp.int32)),
        in_specs=[vmem] * 6,
        out_specs=(vmem, vmem),
        scratch_shapes=[pltpu.VMEM((batch, PAD), jnp.float32)],
        cost_estimate=pl.CostEstimate(flops=flops,
                                      transcendentals=transcendentals,
                                      bytes_accessed=bytes_accessed),
    )(x_f32, params["w_chain"], params["w_big"], params["w2_all"],
      params["b_all"], params["b_big"])

    return policy_output, action[:, 0]


if __name__ == "__main__":
    key = jax.random.PRNGKey(0)
    x = jax.random.normal(key, (B, D_IN), jnp.float32)
    params = make_params(seed=0)

    policy_output, action = world_model_rl(x, params)
    jax.block_until_ready((policy_output, action))

    assert policy_output.shape == (B, 1) and policy_output.dtype == jnp.float32
    assert action.shape == (B,) and action.dtype == jnp.int32
    assert bool(jnp.all(jnp.isfinite(policy_output)))
    assert bool(jnp.all((action >= 0) & (action < N_ACTIONS)))
    print("KERNEL_OK")
</pallas_src>

<mosaic_0001>
module attributes {stable_mosaic.version = 11 : i64} {
  func.func @world_model_kernel(%arg0: memref<8x10xf32, #tpu.memory_space<vmem>>, %arg1: memref<8x128x128xbf16, #tpu.memory_space<vmem>>, %arg2: memref<128x640xbf16, #tpu.memory_space<vmem>>, %arg3: memref<512x128xbf16, #tpu.memory_space<vmem>>, %arg4: memref<9x128xf32, #tpu.memory_space<vmem>>, %arg5: memref<1x640xf32, #tpu.memory_space<vmem>>, %arg6: memref<8x1xf32, #tpu.memory_space<vmem>>, %arg7: memref<8x1xi32, #tpu.memory_space<vmem>>, %arg8: memref<8x128xf32, #tpu.memory_space<vmem>>) attributes {dimension_semantics = [], scalar_prefetch = 0 : i64, scratch_operands = 1 : i64, tpu.core_type = #tpu.core_type<tc>} {
    %cst = arith.constant 0.000000e+00 : f32
    %0 = vector.broadcast %cst : f32 to vector<8x128xf32>
    %c0 = arith.constant 0 : index
    %c0_0 = arith.constant 0 : index
    %1 = vector.load %arg8[%c0, %c0_0] : memref<8x128xf32, #tpu.memory_space<vmem>>, vector<8x128xf32>
    tpu.vector_store %arg8[%c0, %c0_0], %0 {strides = array<i32>} : memref<8x128xf32, #tpu.memory_space<vmem>>, vector<8x128xf32>,
    %c0_1 = arith.constant 0 : index
    %c0_2 = arith.constant 0 : index
    %2 = vector.load %arg0[%c0_1, %c0_2] : memref<8x10xf32, #tpu.memory_space<vmem>>, vector<8x10xf32>
    %c0_3 = arith.constant 0 : index
    %c0_4 = arith.constant 0 : index
    %3 = vector.load %arg8[%c0_3, %c0_4] : memref<8x128xf32, #tpu.memory_space<vmem>>, vector<8x10xf32>
    tpu.vector_store %arg8[%c0_3, %c0_4], %2 {strides = array<i32>} : memref<8x128xf32, #tpu.memory_space<vmem>>, vector<8x10xf32>,
    %c0_5 = arith.constant 0 : index
    %c0_6 = arith.constant 0 : index
    %4 = vector.load %arg8[%c0_5, %c0_6] : memref<8x128xf32, #tpu.memory_space<vmem>>, vector<8x128xf32>
    %5 = tpu.iota {dimensions = array<i32: 1>} : vector<8x128xi32>
    %c0_7 = arith.constant 0 : index
    %c0_8 = arith.constant 0 : index
    %c0_9 = arith.constant 0 : index
    %6 = vector.load %arg1[%c0_7, %c0_8, %c0_9] : memref<8x128x128xbf16, #tpu.memory_space<vmem>>, vector<1x128x128xbf16>
    %7 = vector.shape_cast %6 : vector<1x128x128xbf16> to vector<128x128xbf16>
    %8 = arith.truncf %4 : vector<8x128xf32> to vector<8x128xbf16>
    %cst_10 = arith.constant dense<0.000000e+00> : vector<8x128xf32>
    %9 = tpu.matmul %8, %7, %cst_10 {dimension_numbers = #tpu.dot_dimension_numbers<[1], [0], [0], [1], [0, 0, 1, 1], [], []>} : vector<8x128xbf16>, vector<128x128xbf16>, vector<8x128xf32> -> vector<8x128xf32>
    %c0_11 = arith.constant 0 : index
    %c0_12 = arith.constant 0 : index
    %10 = vector.load %arg4[%c0_11, %c0_12] : memref<9x128xf32, #tpu.memory_space<vmem>>, vector<1x128xf32>
    %11 = vector.broadcast %10 : vector<1x128xf32> to vector<8x128xf32>
    %12 = arith.addf %9, %11 : vector<8x128xf32>
    %cst_13 = arith.constant 0.000000e+00 : f32
    %13 = vector.broadcast %cst_13 : f32 to vector<8x128xf32>
    %14 = arith.maximumf %12, %13 : vector<8x128xf32>
    %cst_14 = arith.constant dense<0.000000e+00> : vector<128xf32>
    %15 = vector.multi_reduction <add>, %14, %cst_14 [0] : vector<8x128xf32> to vector<128xf32>
    %16 = vector.shape_cast %15 : vector<128xf32> to vector<1x128xf32>
    %cst_15 = arith.constant 8.000000e+00 : f32
    %17 = vector.broadcast %cst_15 : f32 to vector<1x128xf32>
    %18 = arith.divf %16, %17 : vector<1x128xf32>
    %19 = vector.broadcast %18 : vector<1x128xf32> to vector<8x128xf32>
    %20 = arith.addf %14, %19 : vector<8x128xf32>
    %c1 = arith.constant 1 : index
    %c0_16 = arith.constant 0 : index
    %c0_17 = arith.constant 0 : index
    %21 = vector.load %arg1[%c1, %c0_16, %c0_17] : memref<8x128x128xbf16, #tpu.memory_space<vmem>>, vector<1x128x128xbf16>
    %22 = vector.shape_cast %21 : vector<1x128x128xbf16> to vector<128x128xbf16>
    %23 = arith.truncf %20 : vector<8x128xf32> to vector<8x128xbf16>
    %cst_18 = arith.constant dense<0.000000e+00> : vector<8x128xf32>
    %24 = tpu.matmul %23, %22, %cst_18 {dimension_numbers = #tpu.dot_dimension_numbers<[1], [0], [0], [1], [0, 0, 1, 1], [], []>} : vector<8x128xbf16>, vector<128x128xbf16>, vector<8x128xf32> -> vector<8x128xf32>
    %c1_19 = arith.constant 1 : index
    %c0_20 = arith.constant 0 : index
    %25 = vector.load %arg4[%c1_19, %c0_20] : memref<9x128xf32, #tpu.memory_space<vmem>>, vector<1x128xf32>
    %26 = vector.broadcast %25 : vector<1x128xf32> to vector<8x128xf32>
    %27 = arith.addf %24, %26 : vector<8x128xf32>
    %cst_21 = arith.constant 0.000000e+00 : f32
    %28 = vector.broadcast %cst_21 : f32 to vector<8x128xf32>
    %29 = arith.maximumf %27, %28 : vector<8x128xf32>
    %c2 = arith.constant 2 : index
    %c0_22 = arith.constant 0 : index
    %c0_23 = arith.constant 0 : index
    %30 = vector.load %arg1[%c2, %c0_22, %c0_23] : memref<8x128x128xbf16, #tpu.memory_space<vmem>>, vector<1x128x128xbf16>
    %31 = vector.shape_cast %30 : vector<1x128x128xbf16> to vector<128x128xbf16>
    %32 = arith.truncf %29 : vector<8x128xf32> to vector<8x128xbf16>
    %cst_24 = arith.constant dense<0.000000e+00> : vector<8x128xf32>
    %33 = tpu.matmul %32, %31, %cst_24 {dimension_numbers = #tpu.dot_dimension_numbers<[1], [0], [0], [1], [0, 0, 1, 1], [], []>} : vector<8x128xbf16>, vector<128x128xbf16>, vector<8x128xf32> -> vector<8x128xf32>
    %c2_25 = arith.constant 2 : index
    %c0_26 = arith.constant 0 : index
    %34 = vector.load %arg4[%c2_25, %c0_26] : memref<9x128xf32, #tpu.memory_space<vmem>>, vector<1x128xf32>
    %35 = vector.broadcast %34 : vector<1x128xf32> to vector<8x128xf32>
    %36 = arith.addf %33, %35 : vector<8x128xf32>
    %37 = math.tanh %36 : vector<8x128xf32>
    %c3 = arith.constant 3 : index
    %c0_27 = arith.constant 0 : index
    %c0_28 = arith.constant 0 : index
    %38 = vector.load %arg1[%c3, %c0_27, %c0_28] : memref<8x128x128xbf16, #tpu.memory_space<vmem>>, vector<1x128x128xbf16>
    %39 = vector.shape_cast %38 : vector<1x128x128xbf16> to vector<128x128xbf16>
    %40 = arith.truncf %37 : vector<8x128xf32> to vector<8x128xbf16>
    %cst_29 = arith.constant dense<0.000000e+00> : vector<8x128xf32>
    %41 = tpu.matmul %40, %39, %cst_29 {dimension_numbers = #tpu.dot_dimension_numbers<[1], [0], [0], [1], [0, 0, 1, 1], [], []>} : vector<8x128xbf16>, vector<128x128xbf16>, vector<8x128xf32> -> vector<8x128xf32>
    %c3_30 = arith.constant 3 : index
    %c0_31 = arith.constant 0 : index
    %42 = vector.load %arg4[%c3_30, %c0_31] : memref<9x128xf32, #tpu.memory_space<vmem>>, vector<1x128xf32>
    %43 = vector.broadcast %42 : vector<1x128xf32> to vector<8x128xf32>
    %44 = arith.addf %41, %43 : vector<8x128xf32>
    %45 = math.tanh %44 : vector<8x128xf32>
    %c4 = arith.constant 4 : index
    %c0_32 = arith.constant 0 : index
    %c0_33 = arith.constant 0 : index
    %46 = vector.load %arg1[%c4, %c0_32, %c0_33] : memref<8x128x128xbf16, #tpu.memory_space<vmem>>, vector<1x128x128xbf16>
    %47 = vector.shape_cast %46 : vector<1x128x128xbf16> to vector<128x128xbf16>
    %48 = arith.truncf %45 : vector<8x128xf32> to vector<8x128xbf16>
    %cst_34 = arith.constant dense<0.000000e+00> : vector<8x128xf32>
    %49 = tpu.matmul %48, %47, %cst_34 {dimension_numbers = #tpu.dot_dimension_numbers<[1], [0], [0], [1], [0, 0, 1, 1], [], []>} : vector<8x128xbf16>, vector<128x128xbf16>, vector<8x128xf32> -> vector<8x128xf32>
    %c4_35 = arith.constant 4 : index
    %c0_36 = arith.constant 0 : index
    %50 = vector.load %arg4[%c4_35, %c0_36] : memref<9x128xf32, #tpu.memory_space<vmem>>, vector<1x128xf32>
    %51 = vector.broadcast %50 : vector<1x128xf32> to vector<8x128xf32>
    %52 = arith.addf %49, %51 : vector<8x128xf32>
    %53 = math.tanh %52 : vector<8x128xf32>
    %c5 = arith.constant 5 : index
    %c0_37 = arith.constant 0 : index
    %c0_38 = arith.constant 0 : index
    %54 = vector.load %arg1[%c5, %c0_37, %c0_38] : memref<8x128x128xbf16, #tpu.memory_space<vmem>>, vector<1x128x128xbf16>
    %55 = vector.shape_cast %54 : vector<1x128x128xbf16> to vector<128x128xbf16>
    %56 = arith.truncf %53 : vector<8x128xf32> to vector<8x128xbf16>
    %cst_39 = arith.constant dense<0.000000e+00> : vector<8x128xf32>
    %57 = tpu.matmul %56, %55, %cst_39 {dimension_numbers = #tpu.dot_dimension_numbers<[1], [0], [0], [1], [0, 0, 1, 1], [], []>} : vector<8x128xbf16>, vector<128x128xbf16>, vector<8x128xf32> -> vector<8x128xf32>
    %c5_40 = arith.constant 5 : index
    %c0_41 = arith.constant 0 : index
    %58 = vector.load %arg4[%c5_40, %c0_41] : memref<9x128xf32, #tpu.memory_space<vmem>>, vector<1x128xf32>
    %59 = vector.broadcast %58 : vector<1x128xf32> to vector<8x128xf32>
    %60 = arith.addf %57, %59 : vector<8x128xf32>
    %c16_i32 = arith.constant 16 : i32
    %61 = vector.broadcast %c16_i32 : i32 to vector<8x128xi32>
    %62 = arith.cmpi sge, %5, %61 : vector<8x128xi32>
    %c32_i32 = arith.constant 32 : i32
    %63 = vector.broadcast %c32_i32 : i32 to vector<8x128xi32>
    %64 = arith.cmpi slt, %5, %63 : vector<8x128xi32>
    %65 = arith.andi %62, %64 : vector<8x128xi1>
    %cst_42 = arith.constant 0.000000e+00 : f32
    %66 = vector.broadcast %cst_42 : f32 to vector<8x128xf32>
    %67 = arith.maximumf %60, %66 : vector<8x128xf32>
    %cst_43 = arith.constant 0.000000e+00 : f32
    %68 = vector.broadcast %cst_43 : f32 to vector<8x128xf32>
    %69 = arith.select %65, %67, %68 : vector<8x128xi1>, vector<8x128xf32>
    %70 = arith.negf %60 : vector<8x128xf32>
    %71 = math.exp %70 : vector<8x128xf32>
    %cst_44 = arith.constant 1.000000e+00 : f32
    %72 = vector.broadcast %cst_44 : f32 to vector<8x128xf32>
    %73 = arith.addf %72, %71 : vector<8x128xf32>
    %74 = arith.divf %72, %73 : vector<8x128xf32>
    %c64_i32 = arith.constant 64 : i32
    %75 = tpu.dynamic_rotate %74 by %c64_i32 dim 1 : vector<8x128xf32>, i32 -> vector<8x128xf32>
    %c6 = arith.constant 6 : index
    %c0_45 = arith.constant 0 : index
    %c0_46 = arith.constant 0 : index
    %76 = vector.load %arg1[%c6, %c0_45, %c0_46] : memref<8x128x128xbf16, #tpu.memory_space<vmem>>, vector<1x128x128xbf16>
    %77 = vector.shape_cast %76 : vector<1x128x128xbf16> to vector<128x128xbf16>
    %78 = arith.truncf %69 : vector<8x128xf32> to vector<8x128xbf16>
    %cst_47 = arith.constant dense<0.000000e+00> : vector<8x128xf32>
    %79 = tpu.matmul %78, %77, %cst_47 {dimension_numbers = #tpu.dot_dimension_numbers<[1], [0], [0], [1], [0, 0, 1, 1], [], []>} : vector<8x128xbf16>, vector<128x128xbf16>, vector<8x128xf32> -> vector<8x128xf32>
    %c6_48 = arith.constant 6 : index
    %c0_49 = arith.constant 0 : index
    %80 = vector.load %arg4[%c6_48, %c0_49] : memref<9x128xf32, #tpu.memory_space<vmem>>, vector<1x128xf32>
    %81 = vector.broadcast %80 : vector<1x128xf32> to vector<8x128xf32>
    %82 = arith.addf %79, %81 : vector<8x128xf32>
    %83 = math.tanh %82 : vector<8x128xf32>
    %84 = arith.addf %69, %83 : vector<8x128xf32>
    %85 = arith.mulf %84, %75 : vector<8x128xf32>
    %c7 = arith.constant 7 : index
    %c0_50 = arith.constant 0 : index
    %c0_51 = arith.constant 0 : index
    %86 = vector.load %arg1[%c7, %c0_50, %c0_51] : memref<8x128x128xbf16, #tpu.memory_space<vmem>>, vector<1x128x128xbf16>
    %87 = vector.shape_cast %86 : vector<1x128x128xbf16> to vector<128x128xbf16>
    %88 = arith.truncf %85 : vector<8x128xf32> to vector<8x128xbf16>
    %cst_52 = arith.constant dense<0.000000e+00> : vector<8x128xf32>
    %89 = tpu.matmul %88, %87, %cst_52 {dimension_numbers = #tpu.dot_dimension_numbers<[1], [0], [0], [1], [0, 0, 1, 1], [], []>} : vector<8x128xbf16>, vector<128x128xbf16>, vector<8x128xf32> -> vector<8x128xf32>
    %c7_53 = arith.constant 7 : index
    %c0_54 = arith.constant 0 : index
    %90 = vector.load %arg4[%c7_53, %c0_54] : memref<9x128xf32, #tpu.memory_space<vmem>>, vector<1x128xf32>
    %91 = vector.broadcast %90 : vector<1x128xf32> to vector<8x128xf32>
    %92 = arith.addf %89, %91 : vector<8x128xf32>
    %93 = arith.negf %92 : vector<8x128xf32>
    %94 = math.exp %93 : vector<8x128xf32>
    %cst_55 = arith.constant 1.000000e+00 : f32
    %95 = vector.broadcast %cst_55 : f32 to vector<8x128xf32>
    %96 = arith.addf %95, %94 : vector<8x128xf32>
    %97 = arith.divf %95, %96 : vector<8x128xf32>
    %98 = arith.mulf %85, %97 : vector<8x128xf32>
    %99 = arith.addf %53, %98 : vector<8x128xf32>
    %c0_56 = arith.constant 0 : index
    %c0_57 = arith.constant 0 : index
    %100 = vector.load %arg2[%c0_56, %c0_57] : memref<128x640xbf16, #tpu.memory_space<vmem>>, vector<128x640xbf16>
    %101 = arith.truncf %99 : vector<8x128xf32> to vector<8x128xbf16>
    %cst_58 = arith.constant dense<0.000000e+00> : vector<8x640xf32>
    %102 = tpu.matmul %101, %100, %cst_58 {dimension_numbers = #tpu.dot_dimension_numbers<[1], [0], [0], [1], [0, 0, 1, 1], [], []>} : vector<8x128xbf16>, vector<128x640xbf16>, vector<8x640xf32> -> vector<8x640xf32>
    %c0_59 = arith.constant 0 : index
    %c0_60 = arith.constant 0 : index
    %103 = vector.load %arg5[%c0_59, %c0_60] : memref<1x640xf32, #tpu.memory_space<vmem>>, vector<1x640xf32>
    %104 = vector.broadcast %103 : vector<1x640xf32> to vector<8x640xf32>
    %105 = arith.addf %102, %104 : vector<8x640xf32>
    %106 = vector.extract_strided_slice %105 {offsets = [0, 0], sizes = [8, 128], strides = [1, 1]} : vector<8x640xf32> to vector<8x128xf32>
    %107 = vector.extract_strided_slice %105 {offsets = [0, 128], sizes = [8, 512], strides = [1, 1]} : vector<8x640xf32> to vector<8x512xf32>
    %cst_61 = arith.constant 0.000000e+00 : f32
    %108 = vector.broadcast %cst_61 : f32 to vector<8x512xf32>
    %109 = arith.maximumf %107, %108 : vector<8x512xf32>
    %c0_62 = arith.constant 0 : index
    %c0_63 = arith.constant 0 : index
    %110 = vector.load %arg3[%c0_62, %c0_63] : memref<512x128xbf16, #tpu.memory_space<vmem>>, vector<512x128xbf16>
    %111 = arith.truncf %109 : vector<8x512xf32> to vector<8x512xbf16>
    %cst_64 = arith.constant dense<0.000000e+00> : vector<8x128xf32>
    %112 = tpu.matmul %111, %110, %cst_64 {dimension_numbers = #tpu.dot_dimension_numbers<[1], [0], [0], [1], [0, 0, 1, 1], [], []>} : vector<8x512xbf16>, vector<512x128xbf16>, vector<8x128xf32> -> vector<8x128xf32>
    %c8 = arith.constant 8 : index
    %c0_65 = arith.constant 0 : index
    %113 = vector.load %arg4[%c8, %c0_65] : memref<9x128xf32, #tpu.memory_space<vmem>>, vector<1x128xf32>
    %114 = vector.broadcast %113 : vector<1x128xf32> to vector<8x128xf32>
    %115 = arith.addf %112, %114 : vector<8x128xf32>
    %c4_i32 = arith.constant 4 : i32
    %116 = vector.broadcast %c4_i32 : i32 to vector<8x128xi32>
    %117 = arith.cmpi slt, %5, %116 : vector<8x128xi32>
    %cst_66 = arith.constant -1.000000e+30 : f32
    %118 = vector.broadcast %cst_66 : f32 to vector<8x128xf32>
    %119 = arith.select %117, %106, %118 : vector<8x128xi1>, vector<8x128xf32>
    %cst_67 = arith.constant dense<0xFF800000> : vector<8xf32>
    %120 = vector.multi_reduction <maximumf>, %119, %cst_67 [1] : vector<8x128xf32> to vector<8xf32>
    %121 = vector.shape_cast %120 : vector<8xf32> to vector<8x1xf32>
    %122 = vector.broadcast %121 : vector<8x1xf32> to vector<8x128xf32>
    %123 = arith.subf %119, %122 : vector<8x128xf32>
    %124 = math.exp %123 : vector<8x128xf32>
    %cst_68 = arith.constant dense<0.000000e+00> : vector<8xf32>
    %125 = vector.multi_reduction <add>, %124, %cst_68 [1] : vector<8x128xf32> to vector<8xf32>
    %126 = vector.shape_cast %125 : vector<8xf32> to vector<8x1xf32>
    %127 = tpu.reciprocal %126 {approx = true} : vector<8x1xf32> -> vector<8x1xf32>
    %128 = vector.broadcast %127 : vector<8x1xf32> to vector<8x128xf32>
    %129 = arith.mulf %124, %128 : vector<8x128xf32>
    %130 = arith.mulf %129, %115 : vector<8x128xf32>
    %cst_69 = arith.constant dense<0.000000e+00> : vector<8xf32>
    %131 = vector.multi_reduction <add>, %130, %cst_69 [1] : vector<8x128xf32> to vector<8xf32>
    %132 = vector.shape_cast %131 : vector<8xf32> to vector<8x1xf32>
    %c16_i32_70 = arith.constant 16 : i32
    %133 = vector.broadcast %c16_i32_70 : i32 to vector<8x128xi32>
    %134 = arith.cmpi sge, %5, %133 : vector<8x128xi32>
    %c19_i32 = arith.constant 19 : i32
    %135 = vector.broadcast %c19_i32 : i32 to vector<8x128xi32>
    %136 = arith.cmpi slt, %5, %135 : vector<8x128xi32>
    %137 = arith.andi %134, %136 : vector<8x128xi1>
    %cst_71 = arith.constant -1.000000e+30 : f32
    %138 = vector.broadcast %cst_71 : f32 to vector<8x128xf32>
    %139 = arith.select %137, %106, %138 : vector<8x128xi1>, vector<8x128xf32>
    %cst_72 = arith.constant dense<0xFF800000> : vector<8xf32>
    %140 = vector.multi_reduction <maximumf>, %139, %cst_72 [1] : vector<8x128xf32> to vector<8xf32>
    %141 = vector.shape_cast %140 : vector<8xf32> to vector<8x1xf32>
    %142 = vector.broadcast %141 : vector<8x1xf32> to vector<8x128xf32>
    %143 = arith.subf %139, %142 : vector<8x128xf32>
    %144 = math.exp %143 : vector<8x128xf32>
    %cst_73 = arith.constant dense<0.000000e+00> : vector<8xf32>
    %145 = vector.multi_reduction <add>, %144, %cst_73 [1] : vector<8x128xf32> to vector<8xf32>
    %146 = vector.shape_cast %145 : vector<8xf32> to vector<8x1xf32>
    %147 = tpu.reciprocal %146 {approx = true} : vector<8x1xf32> -> vector<8x1xf32>
    %148 = vector.broadcast %147 : vector<8x1xf32> to vector<8x128xf32>
    %149 = arith.mulf %144, %148 : vector<8x128xf32>
    %c16_i32_74 = arith.constant 16 : i32
    %150 = vector.broadcast %c16_i32_74 : i32 to vector<8x128xi32>
    %151 = arith.subi %5, %150 : vector<8x128xi32>
    %c1_i32 = arith.constant 1 : i32
    %152 = vector.broadcast %c1_i32 : i32 to vector<8x128xi32>
    %153 = arith.addi %151, %152 : vector<8x128xi32>
    %154 = arith.sitofp %153 : vector<8x128xi32> to vector<8x128xf32>
    %cst_75 = arith.constant 5.000000e-01 : f32
    %155 = vector.broadcast %cst_75 : f32 to vector<8x128xf32>
    %156 = arith.mulf %155, %154 : vector<8x128xf32>
    %cst_76 = arith.constant 0.000000e+00 : f32
    %157 = vector.broadcast %cst_76 : f32 to vector<8x128xf32>
    %158 = arith.select %137, %156, %157 : vector<8x128xi1>, vector<8x128xf32>
    %159 = arith.mulf %149, %158 : vector<8x128xf32>
    %cst_77 = arith.constant dense<0.000000e+00> : vector<8xf32>
    %160 = vector.multi_reduction <add>, %159, %cst_77 [1] : vector<8x128xf32> to vector<8xf32>
    %161 = vector.shape_cast %160 : vector<8xf32> to vector<8x1xf32>
    %c24_i32 = arith.constant 24 : i32
    %162 = vector.broadcast %c24_i32 : i32 to vector<8x128xi32>
    %163 = arith.cmpi eq, %5, %162 : vector<8x128xi32>
    %164 = math.tanh %106 : vector<8x128xf32>
    %cst_78 = arith.constant 0.000000e+00 : f32
    %165 = vector.broadcast %cst_78 : f32 to vector<8x128xf32>
    %166 = arith.select %163, %164, %165 : vector<8x128xi1>, vector<8x128xf32>
    %cst_79 = arith.constant dense<0.000000e+00> : vector<8xf32>
    %167 = vector.multi_reduction <add>, %166, %cst_79 [1] : vector<8x128xf32> to vector<8xf32>
    %168 = vector.shape_cast %167 : vector<8xf32> to vector<8x1xf32>
    %169 = arith.mulf %132, %161 : vector<8x1xf32>
    %170 = arith.addf %169, %168 : vector<8x1xf32>
    %c0_80 = arith.constant 0 : index
    %c0_81 = arith.constant 0 : index
    %171 = vector.load %arg6[%c0_80, %c0_81] : memref<8x1xf32, #tpu.memory_space<vmem>>, vector<8x1xf32>
    tpu.vector_store %arg6[%c0_80, %c0_81], %170 {strides = array<i32>} : memref<8x1xf32, #tpu.memory_space<vmem>>, vector<8x1xf32>,
    %c4_i32_82 = arith.constant 4 : i32
    %172 = vector.broadcast %c4_i32_82 : i32 to vector<8x128xi32>
    %173 = arith.cmpi sge, %5, %172 : vector<8x128xi32>
    %c8_i32 = arith.constant 8 : i32
    %174 = vector.broadcast %c8_i32 : i32 to vector<8x128xi32>
    %175 = arith.cmpi slt, %5, %174 : vector<8x128xi32>
    %176 = arith.andi %173, %175 : vector<8x128xi1>
    %cst_83 = arith.constant -1.000000e+30 : f32
    %177 = vector.broadcast %cst_83 : f32 to vector<8x128xf32>
    %178 = arith.select %176, %106, %177 : vector<8x128xi1>, vector<8x128xf32>
    %cst_84 = arith.constant dense<0xFF800000> : vector<8xf32>
    %179 = vector.multi_reduction <maximumf>, %178, %cst_84 [1] : vector<8x128xf32> to vector<8xf32>
    %180 = vector.shape_cast %179 : vector<8xf32> to vector<8x1xf32>
    %181 = vector.broadcast %180 : vector<8x1xf32> to vector<8x128xf32>
    %182 = arith.cmpf oge, %178, %181 : vector<8x128xf32>
    %183 = arith.andi %176, %182 : vector<8x128xi1>
    %c128_i32 = arith.constant 128 : i32
    %184 = vector.broadcast %c128_i32 : i32 to vector<8x128xi32>
    %185 = arith.select %183, %5, %184 : vector<8x128xi1>, vector<8x128xi32>
    %cst_85 = arith.constant dense<2147483647> : vector<8xi32>
    %186 = vector.multi_reduction <minsi>, %185, %cst_85 [1] : vector<8x128xi32> to vector<8xi32>
    %187 = vector.shape_cast %186 : vector<8xi32> to vector<8x1xi32>
    %c4_i32_86 = arith.constant 4 : i32
    %188 = vector.broadcast %c4_i32_86 : i32 to vector<8x1xi32>
    %189 = arith.subi %187, %188 : vector<8x1xi32>
    %c0_87 = arith.constant 0 : index
    %c0_88 = arith.constant 0 : index
    %190 = vector.load %arg7[%c0_87, %c0_88] : memref<8x1xi32, #tpu.memory_space<vmem>>, vector<8x1xi32>
    tpu.vector_store %arg7[%c0_87, %c0_88], %189 {strides = array<i32>} : memref<8x1xi32, #tpu.memory_space<vmem>>, vector<8x1xi32>,
    return
  }
}

</mosaic_0001>

<llo_original>
// kernel: world_model_rl.1
$region0: #{world_model_rl.1}
  #allocation0 [shape = 'u32[]', space=smem, size = 0x4, offset = 0x4, fixed_abs, tag = 'smem constant byte address 0x4 - core index']
  #allocation1 [shape = 'u32[144,128]{1,0:T(1,128)}', space=vmem, size = 0x12000, scoped, tag = 'internal scratch']
  #allocation2 [shape = 'f32[8,128]{1,0:T(8,128)}', space=vmem, size = 0x1000, scoped, tag = 'scratch operand']
  %s0 = inlined_call_operand.hbm [shape: f32[8,10], index: 0, kind: input, shape index: {}]
  %s1 = inlined_call_operand.hbm [shape: bf16[8,128,128], index: 1, kind: input, shape index: {}]
  %s2 = inlined_call_operand.hbm [shape: bf16[128,640], index: 2, kind: input, shape index: {}]
  %s3 = inlined_call_operand.hbm [shape: bf16[512,128], index: 3, kind: input, shape index: {}]
  %s4 = inlined_call_operand.hbm [shape: f32[9,128], index: 4, kind: input, shape index: {}]
  %s5 = inlined_call_operand.vmem [shape: f32[1,640], index: 5, kind: input, shape index: {}]
  %s6 = inlined_call_operand.vmem [shape: f32[8,1], index: 6, kind: output, shape index: {0}]
  %s7 = inlined_call_operand.vmem [shape: s32[8,1], index: 7, kind: output, shape index: {1}]
  %8 = xla_tuple %s6, %s7
  %s9 = sld [smem:[#allocation0]]
  $region62: #{world_model_rl.1} parent=0
    _
  %s11 = ssub.s32 1, %s9
  %s12 = scalar_select 0, %s11, %s9
  $region1: #{world_model_rl.1} parent=0
    #allocation3 [shape = 'u8[4096]{0}', space=vmem, size = 0x1000, scoped, tag = 'input window, operand 0, single buffered']
    #allocation4 [shape = 's32[1]{0}', space=sflag, size = 0x4, scoped, tag = 'scoped memory for world_model_rl.1']
    #allocation5 [shape = 'u8[262144]{0}', space=vmem, size = 0x40000, scoped, tag = 'input window, operand 1, single buffered']
    #allocation6 [shape = 's32[1]{0}', space=sflag, size = 0x4, scoped, tag = 'scoped memory for world_model_rl.1']
    #allocation7 [shape = 'u8[163840]{0}', space=vmem, size = 0x28000, scoped, tag = 'input window, operand 2, single buffered']
    #allocation8 [shape = 'u8[131072]{0}', space=vmem, size = 0x20000, scoped, tag = 'input window, operand 3, single buffered']
    #allocation9 [shape = 's32[1]{0}', space=sflag, size = 0x4, scoped, tag = 'scoped memory for world_model_rl.1']
    #allocation10 [shape = 'u8[8192]{0}', space=vmem, size = 0x2000, scoped, tag = 'input window, operand 4, single buffered']
    %13 = vsyncpa [#allocation4], 0
    %14 = vsyncpa [#allocation6], 0
    %15 = vsyncpa [#allocation9], 0
    // Predicated region
    $region2: #{world_model_rl.1} parent=1 // pred_check
      _
    $region3: #{world_model_rl.1} parent=1 // pred_check_branch
      %17 = sbr.rel (0) target = $region5
    $region4: #{world_model_rl.1} parent=1 // pred_region
      %s19 = ssub.s32 128, 128
      %20 = vsyncadd [#allocation4], %s19
      %s22 = sshll.u32 [#allocation3], 4
      %s23 = int_to_ptr.vmem [resolvable:$true] %s22
      %25 = dma.hbm_to_vmem [thread:$0]  %s0, 128, %s23, [#allocation4]
    $region5: #{world_model_rl.1} parent=1 // pred_fallthru
      _
    // Predicated region
    $region6: #{world_model_rl.1} parent=1 // pred_check
      _
    $region7: #{world_model_rl.1} parent=1 // pred_check_branch
      %27 = sbr.rel (0) target = $region9
    $region8: #{world_model_rl.1} parent=1 // pred_region
      %s29 = ssub.s32 8192, 8192
      %30 = vsyncadd [#allocation6], %s29
      %s31 = sshll.u32 [#allocation5], 4
      %s32 = int_to_ptr.vmem [resolvable:$true] %s31
      %37 = dma.hbm_to_vmem [thread:$0]  %s1, 8192, %s32, [#allocation6], 64, 64, 4
    $region9: #{world_model_rl.1} parent=1 // pred_fallthru
      _
    // Predicated region
    $region10: #{world_model_rl.1} parent=1 // pred_check
      _
    $region11: #{world_model_rl.1} parent=1 // pred_check_branch
      %39 = sbr.rel (0) target = $region13
    $region12: #{world_model_rl.1} parent=1 // pred_region
      %s41 = ssub.s32 5120, 5120
      %42 = vsyncadd [#allocation6], %s41
      %s43 = sshll.u32 [#allocation7], 4
      %s44 = int_to_ptr.vmem [resolvable:$true] %s43
      %49 = dma.hbm_to_vmem [thread:$0]  %s2, 5120, %s44, [#allocation6], 320, 320, 20
    $region13: #{world_model_rl.1} parent=1 // pred_fallthru
      _
    // Predicated region
    $region14: #{world_model_rl.1} parent=1 // pred_check
      _
    $region15: #{world_model_rl.1} parent=1 // pred_check_branch
      %51 = sbr.rel (0) target = $region17
    $region16: #{world_model_rl.1} parent=1 // pred_region
      %s53 = ssub.s32 4096, 4096
      %54 = vsyncadd [#allocation9], %s53
      %s55 = sshll.u32 [#allocation8], 4
      %s56 = int_to_ptr.vmem [resolvable:$true] %s55
      %61 = dma.hbm_to_vmem [thread:$0]  %s3, 4096, %s56, [#allocation9], 64, 64, 4
    $region17: #{world_model_rl.1} parent=1 // pred_fallthru
      _
    // Predicated region
    $region18: #{world_model_rl.1} parent=1 // pred_check
      _
    $region19: #{world_model_rl.1} parent=1 // pred_check_branch
      %63 = sbr.rel (0) target = $region21
    $region20: #{world_model_rl.1} parent=1 // pred_region
      %s65 = ssub.s32 256, 256
      %66 = vsyncadd [#allocation9], %s65
      %s67 = sshll.u32 [#allocation10], 4
      %s68 = int_to_ptr.vmem [resolvable:$true] %s67
      %73 = dma.hbm_to_vmem [thread:$0]  %s4, 256, %s68, [#allocation9], 128, 128, 8
    $region21: #{world_model_rl.1} parent=1 // pred_fallthru
      _
    // Predicated region
    $region22: #{world_model_rl.1} parent=1 // pred_check
      _
    $region23: #{world_model_rl.1} parent=1 // pred_check_branch
      %75 = sbr.rel (0) target = $region25
    $region24: #{world_model_rl.1} parent=1 // pred_region
      _
    $region25: #{world_model_rl.1} parent=1 // pred_fallthru
      _
    // Predicated region
    $region26: #{world_model_rl.1} parent=1 // pred_check
      _
    $region27: #{world_model_rl.1} parent=1 // pred_check_branch
      %77 = sbr.rel (0) target = $region29
    $region28: #{world_model_rl.1} parent=1 // pred_region
      %78 = dma.done [#allocation4], 128
    $region29: #{world_model_rl.1} parent=1 // pred_fallthru
      _
    // Predicated region
    $region30: #{world_model_rl.1} parent=1 // pred_check
      _
    $region31: #{world_model_rl.1} parent=1 // pred_check_branch
      %80 = sbr.rel (0) target = $region33
    $region32: #{world_model_rl.1} parent=1 // pred_region
      %81 = dma.done [#allocation6], 8192
    $region33: #{world_model_rl.1} parent=1 // pred_fallthru
      _
    // Predicated region
    $region34: #{world_model_rl.1} parent=1 // pred_check
      _
    $region35: #{world_model_rl.1} parent=1 // pred_check_branch
      %83 = sbr.rel (0) target = $region37
    $region36: #{world_model_rl.1} parent=1 // pred_region
      %84 = dma.done [#allocation6], 5120
    $region37: #{world_model_rl.1} parent=1 // pred_fallthru
      _
    // Predicated region
    $region38: #{world_model_rl.1} parent=1 // pred_check
      _
    $region39: #{world_model_rl.1} parent=1 // pred_check_branch
      %86 = sbr.rel (0) target = $region41
    $region40: #{world_model_rl.1} parent=1 // pred_region
      %87 = dma.done [#allocation9], 4096
    $region41: #{world_model_rl.1} parent=1 // pred_fallthru
      _
    // Predicated region
    $region42: #{world_model_rl.1} parent=1 // pred_check
      _
    $region43: #{world_model_rl.1} parent=1 // pred_check_branch
      %89 = sbr.rel (0) target = $region45
    $region44: #{world_model_rl.1} parent=1 // pred_region
      %90 = dma.done [#allocation9], 256
    $region45: #{world_model_rl.1} parent=1 // pred_fallthru
      _
    %92 = vst [vmem:[#allocation2] sm:$0xff] 0.0
    %v93 = vld [vmem:[#allocation3] sm:$0xff]
    %vm94 = vcmask 80896
    %95 = vst.msk [vmem:[#allocation2] sm:$0xff] %vm94, %v93
    %v96 = vld [vmem:[#allocation2] sm:$0xff]
    %v97 = vlaneseq
    %v98 = vand.u32 %v97, 127
    %v99 = vld [vmem:[#allocation5] sm:$0xf]
    %v100 = vld [vmem:[#allocation5 + $0x4] sm:$0xf]
    %v101 = vld [vmem:[#allocation5 + $0x8] sm:$0xf]
    %v102 = vld [vmem:[#allocation5 + $0xc] sm:$0xf]
    %v103 = vld [vmem:[#allocation5 + $0x10] sm:$0xf]
    %v104 = vld [vmem:[#allocation5 + $0x14] sm:$0xf]
    %v105 = vld [vmem:[#allocation5 + $0x18] sm:$0xf]
    %v106 = vld [vmem:[#allocation5 + $0x1c] sm:$0xf]
    %v107 = vld [vmem:[#allocation5 + $0x20] sm:$0xf]
    %v108 = vld [vmem:[#allocation5 + $0x24] sm:$0xf]
    %v109 = vld [vmem:[#allocation5 + $0x28] sm:$0xf]
    %v110 = vld [vmem:[#allocation5 + $0x2c] sm:$0xf]
    %v111 = vld [vmem:[#allocation5 + $0x30] sm:$0xf]
    %v112 = vld [vmem:[#allocation5 + $0x34] sm:$0xf]
    %v113 = vld [vmem:[#allocation5 + $0x38] sm:$0xf]
    %v114 = vld [vmem:[#allocation5 + $0x3c] sm:$0xf]
    %v115 = vpack.c.bf16 %v96, %v96
    %v116 = vld [vmem:[#allocation10] sm:$0x1]
    %v117 = vlaneseq
    %v118 = vshrl.u32 %v117, 7
    %v119 = vsub.s32 0, %v118
    %v120 = vrot.slane %v116, %v119
    %v137 = vunpack.c.l.b16 %v99
    %v138 = vunpack.c.l.b16 %v100
    %v139 = vunpack.c.l.b16 %v101
    %v140 = vunpack.c.l.b16 %v102
    %v141 = vunpack.c.l.b16 %v103
    %v142 = vunpack.c.l.b16 %v104
    %v143 = vunpack.c.l.b16 %v105
    %v144 = vunpack.c.l.b16 %v106
    %v145 = vunpack.c.l.b16 %v107
    %v146 = vunpack.c.l.b16 %v108
    %v147 = vunpack.c.l.b16 %v109
    %v148 = vunpack.c.l.b16 %v110
    %v149 = vunpack.c.l.b16 %v111
    %v150 = vunpack.c.l.b16 %v112
    %v151 = vunpack.c.l.b16 %v113
    %v152 = vunpack.c.l.b16 %v114
    %v153 = vpack.c.b16 %v138, %v137
    %v154 = vpack.c.b16 %v140, %v139
    %v155 = vpack.c.b16 %v142, %v141
    %v156 = vpack.c.b16 %v144, %v143
    %v157 = vpack.c.b16 %v146, %v145
    %v158 = vpack.c.b16 %v148, %v147
    %v159 = vpack.c.b16 %v150, %v149
    %v160 = vpack.c.b16 %v152, %v151
    %169 = vmatprep.subr.bf16.mxu0 0
    %170 = vmatpush1.bf16.msra.mxu0 %v153
    %171 = vmatprep.subr.bf16.mxu0 0
    %172 = vmatpush1.bf16.msra.mxu0 %v154
    %173 = vmatprep.subr.bf16.mxu0 0
    %174 = vmatpush1.bf16.msra.mxu0 %v155
    %175 = vmatprep.subr.bf16.mxu0 0
    %176 = vmatpush1.bf16.msra.mxu0 %v156
    %177 = vmatprep.subr.bf16.mxu0 0
    %178 = vmatpush1.bf16.msra.mxu0 %v157
    %179 = vmatprep.subr.bf16.mxu0 0
    %180 = vmatpush1.bf16.msra.mxu0 %v158
    %181 = vmatprep.subr.bf16.mxu0 0
    %182 = vmatpush1.bf16.msra.mxu0 %v159
    %183 = vmatprep.subr.bf16.mxu0 0
    %184 = vmatpush1.bf16.msra.mxu0 %v160
    %185 = vmatprep.subr.bf16.mxu0 0
    %186 = vmatpush1.bf16.msra.mxu0 0
    %187 = vmatprep.subr.bf16.mxu0 0
    %188 = vmatpush1.bf16.msra.mxu0 0
    %189 = vmatprep.subr.bf16.mxu0 0
    %190 = vmatpush1.bf16.msra.mxu0 0
    %191 = vmatprep.subr.bf16.mxu0 0
    %192 = vmatpush1.bf16.msra.mxu0 0
    %193 = vmatprep.subr.bf16.mxu0 0
    %194 = vmatpush1.bf16.msra.mxu0 0
    %195 = vmatprep.subr.bf16.mxu0 0
    %196 = vmatpush1.bf16.msra.mxu0 0
    %197 = vmatprep.subr.bf16.mxu0 0
    %198 = vmatpush1.bf16.msra.mxu0 0
    %199 = vmatprep.subr.bf16.mxu0 0
    %200 = vmatpush1.bf16.msra.mxu0 0
    %201 = vmatprep.mubr.bf16.mxu0 0
    %202 = vmatmul.mubr.bf16.gmra.mrb[0].mxu0 %v115
    %v203 = vpop.f32.mrb[0].mxu0
    %v204 = vadd.f32 %v120, %v203
    %v205 = vpop.f32.mrb[0].mxu0
    %v206 = vpop.f32.mrb[0].mxu0
    %v207 = vpop.f32.mrb[0].mxu0
    %208 = vdwg.mxu0
    %v209 = vmax.f32 %v204, 0.0
    %v210 = vrot.slane %v209, 4
    %v211 = vadd.f32 %v209, %v210
    %v212 = vrot.slane %v211, 2
    %v213 = vadd.f32 %v211, %v212
    %v214 = vrot.slane %v213, 1
    %v215 = vadd.f32 %v213, %v214
    %v216 = vrcp.pop 8.0
    %v217 = vmul.f32 %v215, %v216
    %v218 = vadd.f32 %v209, %v217
    %s219 = scalar_lea.vmem [#allocation5], 64
    %v220 = vld [vmem:[%s219] sm:$0xf]
    %v221 = vld [vmem:[%s219 + $0x4] sm:$0xf]
    %v222 = vld [vmem:[%s219 + $0x8] sm:$0xf]
    %v223 = vld [vmem:[%s219 + $0xc] sm:$0xf]
    %v224 = vld [vmem:[%s219 + $0x10] sm:$0xf]
    %v225 = vld [vmem:[%s219 + $0x14] sm:$0xf]
    %v226 = vld [vmem:[%s219 + $0x18] sm:$0xf]
    %v227 = vld [vmem:[%s219 + $0x1c] sm:$0xf]
    %v228 = vld [vmem:[%s219 + $0x20] sm:$0xf]
    %v229 = vld [vmem:[%s219 + $0x24] sm:$0xf]
    %v230 = vld [vmem:[%s219 + $0x28] sm:$0xf]
    %v231 = vld [vmem:[%s219 + $0x2c] sm:$0xf]
    %v232 = vld [vmem:[%s219 + $0x30] sm:$0xf]
    %v233 = vld [vmem:[%s219 + $0x34] sm:$0xf]
    %v234 = vld [vmem:[%s219 + $0x38] sm:$0xf]
    %v235 = vld [vmem:[%s219 + $0x3c] sm:$0xf]
    %v236 = vpack.c.bf16 %v218, %v218
    %v237 = vld [vmem:[#allocation10 + $0x1] sm:$0x1]
    %v238 = vlaneseq
    %v239 = vshrl.u32 %v238, 7
    %v240 = vsub.s32 0, %v239
    %v241 = vrot.slane %v237, %v240
    %v258 = vunpack.c.l.b16 %v220
    %v259 = vunpack.c.l.b16 %v221
    %v260 = vunpack.c.l.b16 %v222
    %v261 = vunpack.c.l.b16 %v223
    %v262 = vunpack.c.l.b16 %v224
    %v263 = vunpack.c.l.b16 %v225
    %v264 = vunpack.c.l.b16 %v226
    %v265 = vunpack.c.l.b16 %v227
    %v266 = vunpack.c.l.b16 %v228
    %v267 = vunpack.c.l.b16 %v229
    %v268 = vunpack.c.l.b16 %v230
    %v269 = vunpack.c.l.b16 %v231
    %v270 = vunpack.c.l.b16 %v232
    %v271 = vunpack.c.l.b16 %v233
    %v272 = vunpack.c.l.b16 %v234
    %v273 = vunpack.c.l.b16 %v235
    %v274 = vpack.c.b16 %v259, %v258
    %v275 = vpack.c.b16 %v261, %v260
    %v276 = vpack.c.b16 %v263, %v262
    %v277 = vpack.c.b16 %v265, %v264
    %v278 = vpack.c.b16 %v267, %v266
    %v279 = vpack.c.b16 %v269, %v268
    %v280 = vpack.c.b16 %v271, %v270
    %v281 = vpack.c.b16 %v273, %v272
    %290 = vmatprep.subr.bf16.mxu0 0
    %291 = vmatpush1.bf16.msra.mxu0 %v274
    %292 = vmatprep.subr.bf16.mxu0 0
    %293 = vmatpush1.bf16.msra.mxu0 %v275
    %294 = vmatprep.subr.bf16.mxu0 0
    %295 = vmatpush1.bf16.msra.mxu0 %v276
    %296 = vmatprep.subr.bf16.mxu0 0
    %297 = vmatpush1.bf16.msra.mxu0 %v277
    %298 = vmatprep.subr.bf16.mxu0 0
    %299 = vmatpush1.bf16.msra.mxu0 %v278
    %300 = vmatprep.subr.bf16.mxu0 0
    %301 = vmatpush1.bf16.msra.mxu0 %v279
    %302 = vmatprep.subr.bf16.mxu0 0
    %303 = vmatpush1.bf16.msra.mxu0 %v280
    %304 = vmatprep.subr.bf16.mxu0 0
    %305 = vmatpush1.bf16.msra.mxu0 %v281
    %306 = vmatprep.subr.bf16.mxu0 0
    %307 = vmatpush1.bf16.msra.mxu0 0
    %308 = vmatprep.subr.bf16.mxu0 0
    %309 = vmatpush1.bf16.msra.mxu0 0
    %310 = vmatprep.subr.bf16.mxu0 0
    %311 = vmatpush1.bf16.msra.mxu0 0
    %312 = vmatprep.subr.bf16.mxu0 0
    %313 = vmatpush1.bf16.msra.mxu0 0
    %314 = vmatprep.subr.bf16.mxu0 0
    %315 = vmatpush1.bf16.msra.mxu0 0
    %316 = vmatprep.subr.bf16.mxu0 0
    %317 = vmatpush1.bf16.msra.mxu0 0
    %318 = vmatprep.subr.bf16.mxu0 0
    %319 = vmatpush1.bf16.msra.mxu0 0
    %320 = vmatprep.subr.bf16.mxu0 0
    %321 = vmatpush1.bf16.msra.mxu0 0
    %322 = vmatprep.mubr.bf16.mxu0 0
    %323 = vmatmul.mubr.bf16.gmra.mrb[0].mxu0 %v236
    %v324 = vpop.f32.mrb[0].mxu0
    %v325 = vadd.f32 %v241, %v324
    %v326 = vpop.f32.mrb[0].mxu0
    %v327 = vpop.f32.mrb[0].mxu0
    %v328 = vpop.f32.mrb[0].mxu0
    %329 = vdwg.mxu0
    %v330 = vmax.f32 %v325, 0.0
    %s331 = scalar_lea.vmem [#allocation5], 128
    %v332 = vld [vmem:[%s331] sm:$0xf]
    %v333 = vld [vmem:[%s331 + $0x4] sm:$0xf]
    %v334 = vld [vmem:[%s331 + $0x8] sm:$0xf]
    %v335 = vld [vmem:[%s331 + $0xc] sm:$0xf]
    %v336 = vld [vmem:[%s331 + $0x10] sm:$0xf]
    %v337 = vld [vmem:[%s331 + $0x14] sm:$0xf]
    %v338 = vld [vmem:[%s331 + $0x18] sm:$0xf]
    %v339 = vld [vmem:[%s331 + $0x1c] sm:$0xf]
    %v340 = vld [vmem:[%s331 + $0x20] sm:$0xf]
    %v341 = vld [vmem:[%s331 + $0x24] sm:$0xf]
    %v342 = vld [vmem:[%s331 + $0x28] sm:$0xf]
    %v343 = vld [vmem:[%s331 + $0x2c] sm:$0xf]
    %v344 = vld [vmem:[%s331 + $0x30] sm:$0xf]
    %v345 = vld [vmem:[%s331 + $0x34] sm:$0xf]
    %v346 = vld [vmem:[%s331 + $0x38] sm:$0xf]
    %v347 = vld [vmem:[%s331 + $0x3c] sm:$0xf]
    %v348 = vpack.c.bf16 %v330, %v330
    %v349 = vld [vmem:[#allocation10 + $0x2] sm:$0x1]
    %v350 = vlaneseq
    %v351 = vshrl.u32 %v350, 7
    %v352 = vsub.s32 0, %v351
    %v353 = vrot.slane %v349, %v352
    %v370 = vunpack.c.l.b16 %v332
    %v371 = vunpack.c.l.b16 %v333
    %v372 = vunpack.c.l.b16 %v334
    %v373 = vunpack.c.l.b16 %v335
    %v374 = vunpack.c.l.b16 %v336
    %v375 = vunpack.c.l.b16 %v337
    %v376 = vunpack.c.l.b16 %v338
    %v377 = vunpack.c.l.b16 %v339
    %v378 = vunpack.c.l.b16 %v340
    %v379 = vunpack.c.l.b16 %v341
    %v380 = vunpack.c.l.b16 %v342
    %v381 = vunpack.c.l.b16 %v343
    %v382 = vunpack.c.l.b16 %v344
    %v383 = vunpack.c.l.b16 %v345
    %v384 = vunpack.c.l.b16 %v346
    %v385 = vunpack.c.l.b16 %v347
    %v386 = vpack.c.b16 %v371, %v370
    %v387 = vpack.c.b16 %v373, %v372
    %v388 = vpack.c.b16 %v375, %v374
    %v389 = vpack.c.b16 %v377, %v376
    %v390 = vpack.c.b16 %v379, %v378
    %v391 = vpack.c.b16 %v381, %v380
    %v392 = vpack.c.b16 %v383, %v382
    %v393 = vpack.c.b16 %v385, %v384
    %402 = vmatprep.subr.bf16.mxu0 0
    %403 = vmatpush1.bf16.msra.mxu0 %v386
    %404 = vmatprep.subr.bf16.mxu0 0
    %405 = vmatpush1.bf16.msra.mxu0 %v387
    %406 = vmatprep.subr.bf16.mxu0 0
    %407 = vmatpush1.bf16.msra.mxu0 %v388
    %408 = vmatprep.subr.bf16.mxu0 0
    %409 = vmatpush1.bf16.msra.mxu0 %v389
    %410 = vmatprep.subr.bf16.mxu0 0
    %411 = vmatpush1.bf16.msra.mxu0 %v390
    %412 = vmatprep.subr.bf16.mxu0 0
    %413 = vmatpush1.bf16.msra.mxu0 %v391
    %414 = vmatprep.subr.bf16.mxu0 0
    %415 = vmatpush1.bf16.msra.mxu0 %v392
    %416 = vmatprep.subr.bf16.mxu0 0
    %417 = vmatpush1.bf16.msra.mxu0 %v393
    %418 = vmatprep.subr.bf16.mxu0 0
    %419 = vmatpush1.bf16.msra.mxu0 0
    %420 = vmatprep.subr.bf16.mxu0 0
    %421 = vmatpush1.bf16.msra.mxu0 0
    %422 = vmatprep.subr.bf16.mxu0 0
    %423 = vmatpush1.bf16.msra.mxu0 0
    %424 = vmatprep.subr.bf16.mxu0 0
    %425 = vmatpush1.bf16.msra.mxu0 0
    %426 = vmatprep.subr.bf16.mxu0 0
    %427 = vmatpush1.bf16.msra.mxu0 0
    %428 = vmatprep.subr.bf16.mxu0 0
    %429 = vmatpush1.bf16.msra.mxu0 0
    %430 = vmatprep.subr.bf16.mxu0 0
    %431 = vmatpush1.bf16.msra.mxu0 0
    %432 = vmatprep.subr.bf16.mxu0 0
    %433 = vmatpush1.bf16.msra.mxu0 0
    %434 = vmatprep.mubr.bf16.mxu0 0
    %435 = vmatmul.mubr.bf16.gmra.mrb[0].mxu0 %v348
    %v436 = vpop.f32.mrb[0].mxu0
    %v437 = vadd.f32 %v353, %v436
    %v438 = vpop.f32.mrb[0].mxu0
    %v439 = vpop.f32.mrb[0].mxu0
    %v440 = vpop.f32.mrb[0].mxu0
    %441 = vdwg.mxu0
    %v442 = vtanh.pop %v437
    %s443 = scalar_lea.vmem [#allocation5], 192
    %v444 = vld [vmem:[%s443] sm:$0xf]
    %v445 = vld [vmem:[%s443 + $0x4] sm:$0xf]
    %v446 = vld [vmem:[%s443 + $0x8] sm:$0xf]
    %v447 = vld [vmem:[%s443 + $0xc] sm:$0xf]
    %v448 = vld [vmem:[%s443 + $0x10] sm:$0xf]
    %v449 = vld [vmem:[%s443 + $0x14] sm:$0xf]
    %v450 = vld [vmem:[%s443 + $0x18] sm:$0xf]
    %v451 = vld [vmem:[%s443 + $0x1c] sm:$0xf]
    %v452 = vld [vmem:[%s443 + $0x20] sm:$0xf]
    %v453 = vld [vmem:[%s443 + $0x24] sm:$0xf]
    %v454 = vld [vmem:[%s443 + $0x28] sm:$0xf]
    %v455 = vld [vmem:[%s443 + $0x2c] sm:$0xf]
    %v456 = vld [vmem:[%s443 + $0x30] sm:$0xf]
    %v457 = vld [vmem:[%s443 + $0x34] sm:$0xf]
    %v458 = vld [vmem:[%s443 + $0x38] sm:$0xf]
    %v459 = vld [vmem:[%s443 + $0x3c] sm:$0xf]
    %v460 = vpack.c.bf16 %v442, %v442
    %v461 = vld [vmem:[#allocation10 + $0x3] sm:$0x1]
    %v462 = vlaneseq
    %v463 = vshrl.u32 %v462, 7
    %v464 = vsub.s32 0, %v463
    %v465 = vrot.slane %v461, %v464
    %v482 = vunpack.c.l.b16 %v444
    %v483 = vunpack.c.l.b16 %v445
    %v484 = vunpack.c.l.b16 %v446
    %v485 = vunpack.c.l.b16 %v447
    %v486 = vunpack.c.l.b16 %v448
    %v487 = vunpack.c.l.b16 %v449
    %v488 = vunpack.c.l.b16 %v450
    %v489 = vunpack.c.l.b16 %v451
    %v490 = vunpack.c.l.b16 %v452
    %v491 = vunpack.c.l.b16 %v453
    %v492 = vunpack.c.l.b16 %v454
    %v493 = vunpack.c.l.b16 %v455
    %v494 = vunpack.c.l.b16 %v456
    %v495 = vunpack.c.l.b16 %v457
    %v496 = vunpack.c.l.b16 %v458
    %v497 = vunpack.c.l.b16 %v459
    %v498 = vpack.c.b16 %v483, %v482
    %v499 = vpack.c.b16 %v485, %v484
    %v500 = vpack.c.b16 %v487, %v486
    %v501 = vpack.c.b16 %v489, %v488
    %v502 = vpack.c.b16 %v491, %v490
    %v503 = vpack.c.b16 %v493, %v492
    %v504 = vpack.c.b16 %v495, %v494
    %v505 = vpack.c.b16 %v497, %v496
    %514 = vmatprep.subr.bf16.mxu0 0
    %515 = vmatpush1.bf16.msra.mxu0 %v498
    %516 = vmatprep.subr.bf16.mxu0 0
    %517 = vmatpush1.bf16.msra.mxu0 %v499
    %518 = vmatprep.subr.bf16.mxu0 0
    %519 = vmatpush1.bf16.msra.mxu0 %v500
    %520 = vmatprep.subr.bf16.mxu0 0
    %521 = vmatpush1.bf16.msra.mxu0 %v501
    %522 = vmatprep.subr.bf16.mxu0 0
    %523 = vmatpush1.bf16.msra.mxu0 %v502
    %524 = vmatprep.subr.bf16.mxu0 0
    %525 = vmatpush1.bf16.msra.mxu0 %v503
    %526 = vmatprep.subr.bf16.mxu0 0
    %527 = vmatpush1.bf16.msra.mxu0 %v504
    %528 = vmatprep.subr.bf16.mxu0 0
    %529 = vmatpush1.bf16.msra.mxu0 %v505
    %530 = vmatprep.subr.bf16.mxu0 0
    %531 = vmatpush1.bf16.msra.mxu0 0
    %532 = vmatprep.subr.bf16.mxu0 0
    %533 = vmatpush1.bf16.msra.mxu0 0
    %534 = vmatprep.subr.bf16.mxu0 0
    %535 = vmatpush1.bf16.msra.mxu0 0
    %536 = vmatprep.subr.bf16.mxu0 0
    %537 = vmatpush1.bf16.msra.mxu0 0
    %538 = vmatprep.subr.bf16.mxu0 0
    %539 = vmatpush1.bf16.msra.mxu0 0
    %540 = vmatprep.subr.bf16.mxu0 0
    %541 = vmatpush1.bf16.msra.mxu0 0
    %542 = vmatprep.subr.bf16.mxu0 0
    %543 = vmatpush1.bf16.msra.mxu0 0
    %544 = vmatprep.subr.bf16.mxu0 0
    %545 = vmatpush1.bf16.msra.mxu0 0
    %546 = vmatprep.mubr.bf16.mxu0 0
    %547 = vmatmul.mubr.bf16.gmra.mrb[0].mxu0 %v460
    %v548 = vpop.f32.mrb[0].mxu0
    %v549 = vadd.f32 %v465, %v548
    %v550 = vpop.f32.mrb[0].mxu0
    %v551 = vpop.f32.mrb[0].mxu0
    %v552 = vpop.f32.mrb[0].mxu0
    %553 = vdwg.mxu0
    %v554 = vtanh.pop %v549
    %s555 = scalar_lea.vmem [#allocation5], 256
    %v556 = vld [vmem:[%s555] sm:$0xf]
    %v557 = vld [vmem:[%s555 + $0x4] sm:$0xf]
    %v558 = vld [vmem:[%s555 + $0x8] sm:$0xf]
    %v559 = vld [vmem:[%s555 + $0xc] sm:$0xf]
    %v560 = vld [vmem:[%s555 + $0x10] sm:$0xf]
    %v561 = vld [vmem:[%s555 + $0x14] sm:$0xf]
    %v562 = vld [vmem:[%s555 + $0x18] sm:$0xf]
    %v563 = vld [vmem:[%s555 + $0x1c] sm:$0xf]
    %v564 = vld [vmem:[%s555 + $0x20] sm:$0xf]
    %v565 = vld [vmem:[%s555 + $0x24] sm:$0xf]
    %v566 = vld [vmem:[%s555 + $0x28] sm:$0xf]
    %v567 = vld [vmem:[%s555 + $0x2c] sm:$0xf]
    %v568 = vld [vmem:[%s555 + $0x30] sm:$0xf]
    %v569 = vld [vmem:[%s555 + $0x34] sm:$0xf]
    %v570 = vld [vmem:[%s555 + $0x38] sm:$0xf]
    %v571 = vld [vmem:[%s555 + $0x3c] sm:$0xf]
    %v572 = vpack.c.bf16 %v554, %v554
    %v573 = vld [vmem:[#allocation10 + $0x4] sm:$0x1]
    %v574 = vlaneseq
    %v575 = vshrl.u32 %v574, 7
    %v576 = vsub.s32 0, %v575
    %v577 = vrot.slane %v573, %v576
    %v594 = vunpack.c.l.b16 %v556
    %v595 = vunpack.c.l.b16 %v557
    %v596 = vunpack.c.l.b16 %v558
    %v597 = vunpack.c.l.b16 %v559
    %v598 = vunpack.c.l.b16 %v560
    %v599 = vunpack.c.l.b16 %v561
    %v600 = vunpack.c.l.b16 %v562
    %v601 = vunpack.c.l.b16 %v563
    %v602 = vunpack.c.l.b16 %v564
    %v603 = vunpack.c.l.b16 %v565
    %v604 = vunpack.c.l.b16 %v566
    %v605 = vunpack.c.l.b16 %v567
    %v606 = vunpack.c.l.b16 %v568
    %v607 = vunpack.c.l.b16 %v569
    %v608 = vunpack.c.l.b16 %v570
    %v609 = vunpack.c.l.b16 %v571
    %v610 = vpack.c.b16 %v595, %v594
    %v611 = vpack.c.b16 %v597, %v596
    %v612 = vpack.c.b16 %v599, %v598
    %v613 = vpack.c.b16 %v601, %v600
    %v614 = vpack.c.b16 %v603, %v602
    %v615 = vpack.c.b16 %v605, %v604
    %v616 = vpack.c.b16 %v607, %v606
    %v617 = vpack.c.b16 %v609, %v608
    %626 = vmatprep.subr.bf16.mxu0 0
    %627 = vmatpush1.bf16.msra.mxu0 %v610
    %628 = vmatprep.subr.bf16.mxu0 0
    %629 = vmatpush1.bf16.msra.mxu0 %v611
    %630 = vmatprep.subr.bf16.mxu0 0
    %631 = vmatpush1.bf16.msra.mxu0 %v612
    %632 = vmatprep.subr.bf16.mxu0 0
    %633 = vmatpush1.bf16.msra.mxu0 %v613
    %634 = vmatprep.subr.bf16.mxu0 0
    %635 = vmatpush1.bf16.msra.mxu0 %v614
    %636 = vmatprep.subr.bf16.mxu0 0
    %637 = vmatpush1.bf16.msra.mxu0 %v615
    %638 = vmatprep.subr.bf16.mxu0 0
    %639 = vmatpush1.bf16.msra.mxu0 %v616
    %640 = vmatprep.subr.bf16.mxu0 0
    %641 = vmatpush1.bf16.msra.mxu0 %v617
    %642 = vmatprep.subr.bf16.mxu0 0
    %643 = vmatpush1.bf16.msra.mxu0 0
    %644 = vmatprep.subr.bf16.mxu0 0
    %645 = vmatpush1.bf16.msra.mxu0 0
    %646 = vmatprep.subr.bf16.mxu0 0
    %647 = vmatpush1.bf16.msra.mxu0 0
    %648 = vmatprep.subr.bf16.mxu0 0
    %649 = vmatpush1.bf16.msra.mxu0 0
    %650 = vmatprep.subr.bf16.mxu0 0
    %651 = vmatpush1.bf16.msra.mxu0 0
    %652 = vmatprep.subr.bf16.mxu0 0
    %653 = vmatpush1.bf16.msra.mxu0 0
    %654 = vmatprep.subr.bf16.mxu0 0
    %655 = vmatpush1.bf16.msra.mxu0 0
    %656 = vmatprep.subr.bf16.mxu0 0
    %657 = vmatpush1.bf16.msra.mxu0 0
    %658 = vmatprep.mubr.bf16.mxu0 0
    %659 = vmatmul.mubr.bf16.gmra.mrb[0].mxu0 %v572
    %v660 = vpop.f32.mrb[0].mxu0
    %v661 = vadd.f32 %v577, %v660
    %v662 = vpop.f32.mrb[0].mxu0
    %v663 = vpop.f32.mrb[0].mxu0
    %v664 = vpop.f32.mrb[0].mxu0
    %665 = vdwg.mxu0
    %v666 = vtanh.pop %v661
    %s667 = scalar_lea.vmem [#allocation5], 320
    %v668 = vld [vmem:[%s667] sm:$0xf]
    %v669 = vld [vmem:[%s667 + $0x4] sm:$0xf]
    %v670 = vld [vmem:[%s667 + $0x8] sm:$0xf]
    %v671 = vld [vmem:[%s667 + $0xc] sm:$0xf]
    %v672 = vld [vmem:[%s667 + $0x10] sm:$0xf]
    %v673 = vld [vmem:[%s667 + $0x14] sm:$0xf]
    %v674 = vld [vmem:[%s667 + $0x18] sm:$0xf]
    %v675 = vld [vmem:[%s667 + $0x1c] sm:$0xf]
    %v676 = vld [vmem:[%s667 + $0x20] sm:$0xf]
    %v677 = vld [vmem:[%s667 + $0x24] sm:$0xf]
    %v678 = vld [vmem:[%s667 + $0x28] sm:$0xf]
    %v679 = vld [vmem:[%s667 + $0x2c] sm:$0xf]
    %v680 = vld [vmem:[%s667 + $0x30] sm:$0xf]
    %v681 = vld [vmem:[%s667 + $0x34] sm:$0xf]
    %v682 = vld [vmem:[%s667 + $0x38] sm:$0xf]
    %v683 = vld [vmem:[%s667 + $0x3c] sm:$0xf]
    %v684 = vpack.c.bf16 %v666, %v666
    %v685 = vld [vmem:[#allocation10 + $0x5] sm:$0x1]
    %v686 = vlaneseq
    %v687 = vshrl.u32 %v686, 7
    %v688 = vsub.s32 0, %v687
    %v689 = vrot.slane %v685, %v688
    %v706 = vunpack.c.l.b16 %v668
    %v707 = vunpack.c.l.b16 %v669
    %v708 = vunpack.c.l.b16 %v670
    %v709 = vunpack.c.l.b16 %v671
    %v710 = vunpack.c.l.b16 %v672
    %v711 = vunpack.c.l.b16 %v673
    %v712 = vunpack.c.l.b16 %v674
    %v713 = vunpack.c.l.b16 %v675
    %v714 = vunpack.c.l.b16 %v676
    %v715 = vunpack.c.l.b16 %v677
    %v716 = vunpack.c.l.b16 %v678
    %v717 = vunpack.c.l.b16 %v679
    %v718 = vunpack.c.l.b16 %v680
    %v719 = vunpack.c.l.b16 %v681
    %v720 = vunpack.c.l.b16 %v682
    %v721 = vunpack.c.l.b16 %v683
    %v722 = vpack.c.b16 %v707, %v706
    %v723 = vpack.c.b16 %v709, %v708
    %v724 = vpack.c.b16 %v711, %v710
    %v725 = vpack.c.b16 %v713, %v712
    %v726 = vpack.c.b16 %v715, %v714
    %v727 = vpack.c.b16 %v717, %v716
    %v728 = vpack.c.b16 %v719, %v718
    %v729 = vpack.c.b16 %v721, %v720
    %738 = vmatprep.subr.bf16.mxu0 0
    %739 = vmatpush1.bf16.msra.mxu0 %v722
    %740 = vmatprep.subr.bf16.mxu0 0
    %741 = vmatpush1.bf16.msra.mxu0 %v723
    %742 = vmatprep.subr.bf16.mxu0 0
    %743 = vmatpush1.bf16.msra.mxu0 %v724
    %744 = vmatprep.subr.bf16.mxu0 0
    %745 = vmatpush1.bf16.msra.mxu0 %v725
    %746 = vmatprep.subr.bf16.mxu0 0
    %747 = vmatpush1.bf16.msra.mxu0 %v726
    %748 = vmatprep.subr.bf16.mxu0 0
    %749 = vmatpush1.bf16.msra.mxu0 %v727
    %750 = vmatprep.subr.bf16.mxu0 0
    %751 = vmatpush1.bf16.msra.mxu0 %v728
    %752 = vmatprep.subr.bf16.mxu0 0
    %753 = vmatpush1.bf16.msra.mxu0 %v729
    %754 = vmatprep.subr.bf16.mxu0 0
    %755 = vmatpush1.bf16.msra.mxu0 0
    %756 = vmatprep.subr.bf16.mxu0 0
    %757 = vmatpush1.bf16.msra.mxu0 0
    %758 = vmatprep.subr.bf16.mxu0 0
    %759 = vmatpush1.bf16.msra.mxu0 0
    %760 = vmatprep.subr.bf16.mxu0 0
    %761 = vmatpush1.bf16.msra.mxu0 0
    %762 = vmatprep.subr.bf16.mxu0 0
    %763 = vmatpush1.bf16.msra.mxu0 0
    %764 = vmatprep.subr.bf16.mxu0 0
    %765 = vmatpush1.bf16.msra.mxu0 0
    %766 = vmatprep.subr.bf16.mxu0 0
    %767 = vmatpush1.bf16.msra.mxu0 0
    %768 = vmatprep.subr.bf16.mxu0 0
    %769 = vmatpush1.bf16.msra.mxu0 0
    %770 = vmatprep.mubr.bf16.mxu0 0
    %771 = vmatmul.mubr.bf16.gmra.mrb[0].mxu0 %v684
    %v772 = vpop.f32.mrb[0].mxu0
    %v773 = vadd.f32 %v689, %v772
    %v774 = vpop.f32.mrb[0].mxu0
    %v775 = vpop.f32.mrb[0].mxu0
    %v776 = vpop.f32.mrb[0].mxu0
    %777 = vdwg.mxu0
    %vm778 = vcmp.ge.s32.totalorder %v98, 16
    %vm779 = vcmp.lt.s32.totalorder %v98, 32
    %vm780 = vmand %vm778, %vm779
    %v781 = vmax.f32 %v773, 0.0
    %v782 = vsel %vm780, %v781, 0.0
    %v783 = vxor.u32 %v773, 2147483648
    %v784 = vmul.f32 %v783, 1.442695
    %v785 = vpow.pop %v784
    %v786 = vadd.f32 %v785, 1.0
    %v787 = vrcp.pop %v786
    %v788 = vmul.f32 1.0, %v787
    %789 = vrot.lane.b32.xlu0 %v788, 64
    %v790 = vpop.permute.xlu0 %789
    %s791 = scalar_lea.vmem [#allocation5], 384
    %v792 = vld [vmem:[%s791] sm:$0xf]
    %v793 = vld [vmem:[%s791 + $0x4] sm:$0xf]
    %v794 = vld [vmem:[%s791 + $0x8] sm:$0xf]
    %v795 = vld [vmem:[%s791 + $0xc] sm:$0xf]
    %v796 = vld [vmem:[%s791 + $0x10] sm:$0xf]
    %v797 = vld [vmem:[%s791 + $0x14] sm:$0xf]
    %v798 = vld [vmem:[%s791 + $0x18] sm:$0xf]
    %v799 = vld [vmem:[%s791 + $0x1c] sm:$0xf]
    %v800 = vld [vmem:[%s791 + $0x20] sm:$0xf]
    %v801 = vld [vmem:[%s791 + $0x24] sm:$0xf]
    %v802 = vld [vmem:[%s791 + $0x28] sm:$0xf]
    %v803 = vld [vmem:[%s791 + $0x2c] sm:$0xf]
    %v804 = vld [vmem:[%s791 + $0x30] sm:$0xf]
    %v805 = vld [vmem:[%s791 + $0x34] sm:$0xf]
    %v806 = vld [vmem:[%s791 + $0x38] sm:$0xf]
    %v807 = vld [vmem:[%s791 + $0x3c] sm:$0xf]
    %v808 = vpack.c.bf16 %v782, %v782
    %v809 = vld [vmem:[#allocation10 + $0x6] sm:$0x1]
    %v810 = vlaneseq
    %v811 = vshrl.u32 %v810, 7
    %v812 = vsub.s32 0, %v811
    %v813 = vrot.slane %v809, %v812
    %v830 = vunpack.c.l.b16 %v792
    %v831 = vunpack.c.l.b16 %v793
    %v832 = vunpack.c.l.b16 %v794
    %v833 = vunpack.c.l.b16 %v795
    %v834 = vunpack.c.l.b16 %v796
    %v835 = vunpack.c.l.b16 %v797
    %v836 = vunpack.c.l.b16 %v798
    %v837 = vunpack.c.l.b16 %v799
    %v838 = vunpack.c.l.b16 %v800
    %v839 = vunpack.c.l.b16 %v801
    %v840 = vunpack.c.l.b16 %v802
    %v841 = vunpack.c.l.b16 %v803
    %v842 = vunpack.c.l.b16 %v804
    %v843 = vunpack.c.l.b16 %v805
    %v844 = vunpack.c.l.b16 %v806
    %v845 = vunpack.c.l.b16 %v807
    %v846 = vpack.c.b16 %v831, %v830
    %v847 = vpack.c.b16 %v833, %v832
    %v848 = vpack.c.b16 %v835, %v834
    %v849 = vpack.c.b16 %v837, %v836
    %v850 = vpack.c.b16 %v839, %v838
    %v851 = vpack.c.b16 %v841, %v840
    %v852 = vpack.c.b16 %v843, %v842
    %v853 = vpack.c.b16 %v845, %v844
    %862 = vmatprep.subr.bf16.mxu0 0
    %863 = vmatpush1.bf16.msra.mxu0 %v846
    %864 = vmatprep.subr.bf16.mxu0 0
    %865 = vmatpush1.bf16.msra.mxu0 %v847
    %866 = vmatprep.subr.bf16.mxu0 0
    %867 = vmatpush1.bf16.msra.mxu0 %v848
    %868 = vmatprep.subr.bf16.mxu0 0
    %869 = vmatpush1.bf16.msra.mxu0 %v849
    %870 = vmatprep.subr.bf16.mxu0 0
    %871 = vmatpush1.bf16.msra.mxu0 %v850
    %872 = vmatprep.subr.bf16.mxu0 0
    %873 = vmatpush1.bf16.msra.mxu0 %v851
    %874 = vmatprep.subr.bf16.mxu0 0
    %875 = vmatpush1.bf16.msra.mxu0 %v852
    %876 = vmatprep.subr.bf16.mxu0 0
    %877 = vmatpush1.bf16.msra.mxu0 %v853
    %878 = vmatprep.subr.bf16.mxu0 0
    %879 = vmatpush1.bf16.msra.mxu0 0
    %880 = vmatprep.subr.bf16.mxu0 0
    %881 = vmatpush1.bf16.msra.mxu0 0
    %882 = vmatprep.subr.bf16.mxu0 0
    %883 = vmatpush1.bf16.msra.mxu0 0
    %884 = vmatprep.subr.bf16.mxu0 0
    %885 = vmatpush1.bf16.msra.mxu0 0
    %886 = vmatprep.subr.bf16.mxu0 0
    %887 = vmatpush1.bf16.msra.mxu0 0
    %888 = vmatprep.subr.bf16.mxu0 0
    %889 = vmatpush1.bf16.msra.mxu0 0
    %890 = vmatprep.subr.bf16.mxu0 0
    %891 = vmatpush1.bf16.msra.mxu0 0
    %892 = vmatprep.subr.bf16.mxu0 0
    %893 = vmatpush1.bf16.msra.mxu0 0
    %894 = vmatprep.mubr.bf16.mxu0 0
    %895 = vmatmul.mubr.bf16.gmra.mrb[0].mxu0 %v808
    %v896 = vpop.f32.mrb[0].mxu0
    %v897 = vadd.f32 %v813, %v896
    %v898 = vpop.f32.mrb[0].mxu0
    %v899 = vpop.f32.mrb[0].mxu0
    %v900 = vpop.f32.mrb[0].mxu0
    %901 = vdwg.mxu0
    %v902 = vtanh.pop %v897
    %v903 = vadd.f32 %v782, %v902
    %v904 = vmul.f32 %v903, %v790
    %s905 = scalar_lea.vmem [#allocation5], 448
    %v906 = vld [vmem:[%s905] sm:$0xf]
    %v907 = vld [vmem:[%s905 + $0x4] sm:$0xf]
    %v908 = vld [vmem:[%s905 + $0x8] sm:$0xf]
    %v909 = vld [vmem:[%s905 + $0xc] sm:$0xf]
    %v910 = vld [vmem:[%s905 + $0x10] sm:$0xf]
    %v911 = vld [vmem:[%s905 + $0x14] sm:$0xf]
    %v912 = vld [vmem:[%s905 + $0x18] sm:$0xf]
    %v913 = vld [vmem:[%s905 + $0x1c] sm:$0xf]
    %v914 = vld [vmem:[%s905 + $0x20] sm:$0xf]
    %v915 = vld [vmem:[%s905 + $0x24] sm:$0xf]
    %v916 = vld [vmem:[%s905 + $0x28] sm:$0xf]
    %v917 = vld [vmem:[%s905 + $0x2c] sm:$0xf]
    %v918 = vld [vmem:[%s905 + $0x30] sm:$0xf]
    %v919 = vld [vmem:[%s905 + $0x34] sm:$0xf]
    %v920 = vld [vmem:[%s905 + $0x38] sm:$0xf]
    %v921 = vld [vmem:[%s905 + $0x3c] sm:$0xf]
    %v922 = vpack.c.bf16 %v904, %v904
    %v923 = vld [vmem:[#allocation10 + $0x7] sm:$0x1]
    %v924 = vlaneseq
    %v925 = vshrl.u32 %v924, 7
    %v926 = vsub.s32 0, %v925
    %v927 = vrot.slane %v923, %v926
    %v944 = vunpack.c.l.b16 %v906
    %v945 = vunpack.c.l.b16 %v907
    %v946 = vunpack.c.l.b16 %v908
    %v947 = vunpack.c.l.b16 %v909
    %v948 = vunpack.c.l.b16 %v910
    %v949 = vunpack.c.l.b16 %v911
    %v950 = vunpack.c.l.b16 %v912
    %v951 = vunpack.c.l.b16 %v913
    %v952 = vunpack.c.l.b16 %v914
    %v953 = vunpack.c.l.b16 %v915
    %v954 = vunpack.c.l.b16 %v916
    %v955 = vunpack.c.l.b16 %v917
    %v956 = vunpack.c.l.b16 %v918
    %v957 = vunpack.c.l.b16 %v919
    %v958 = vunpack.c.l.b16 %v920
    %v959 = vunpack.c.l.b16 %v921
    %v960 = vpack.c.b16 %v945, %v944
    %v961 = vpack.c.b16 %v947, %v946
    %v962 = vpack.c.b16 %v949, %v948
    %v963 = vpack.c.b16 %v951, %v950
    %v964 = vpack.c.b16 %v953, %v952
    %v965 = vpack.c.b16 %v955, %v954
    %v966 = vpack.c.b16 %v957, %v956
    %v967 = vpack.c.b16 %v959, %v958
    %976 = vmatprep.subr.bf16.mxu0 0
    %977 = vmatpush1.bf16.msra.mxu0 %v960
    %978 = vmatprep.subr.bf16.mxu0 0
    %979 = vmatpush1.bf16.msra.mxu0 %v961
    %980 = vmatprep.subr.bf16.mxu0 0
    %981 = vmatpush1.bf16.msra.mxu0 %v962
    %982 = vmatprep.subr.bf16.mxu0 0
    %983 = vmatpush1.bf16.msra.mxu0 %v963
    %984 = vmatprep.subr.bf16.mxu0 0
    %985 = vmatpush1.bf16.msra.mxu0 %v964
    %986 = vmatprep.subr.bf16.mxu0 0
    %987 = vmatpush1.bf16.msra.mxu0 %v965
    %988 = vmatprep.subr.bf16.mxu0 0
    %989 = vmatpush1.bf16.msra.mxu0 %v966
    %990 = vmatprep.subr.bf16.mxu0 0
    %991 = vmatpush1.bf16.msra.mxu0 %v967
    %992 = vmatprep.subr.bf16.mxu0 0
    %993 = vmatpush1.bf16.msra.mxu0 0
    %994 = vmatprep.subr.bf16.mxu0 0
    %995 = vmatpush1.bf16.msra.mxu0 0
    %996 = vmatprep.subr.bf16.mxu0 0
    %997 = vmatpush1.bf16.msra.mxu0 0
    %998 = vmatprep.subr.bf16.mxu0 0
    %999 = vmatpush1.bf16.msra.mxu0 0
    %1000 = vmatprep.subr.bf16.mxu0 0
    %1001 = vmatpush1.bf16.msra.mxu0 0
    %1002 = vmatprep.subr.bf16.mxu0 0
    %1003 = vmatpush1.bf16.msra.mxu0 0
    %1004 = vmatprep.subr.bf16.mxu0 0
    %1005 = vmatpush1.bf16.msra.mxu0 0
    %1006 = vmatprep.subr.bf16.mxu0 0
    %1007 = vmatpush1.bf16.msra.mxu0 0
    %1008 = vmatprep.mubr.bf16.mxu0 0
    %1009 = vmatmul.mubr.bf16.gmra.mrb[0].mxu0 %v922
    %v1010 = vpop.f32.mrb[0].mxu0
    %v1011 = vadd.f32 %v927, %v1010
    %v1012 = vpop.f32.mrb[0].mxu0
    %v1013 = vpop.f32.mrb[0].mxu0
    %v1014 = vpop.f32.mrb[0].mxu0
    %1015 = vdwg.mxu0
    %v1016 = vxor.u32 %v1011, 2147483648
    %v1017 = vmul.f32 %v1016, 1.442695
    %v1018 = vpow.pop %v1017
    %v1019 = vadd.f32 %v1018, 1.0
    %v1020 = vrcp.pop %v1019
    %v1021 = vmul.f32 1.0, %v1020
    %v1022 = vmul.f32 %v904, %v1021
    %v1023 = vadd.f32 %v666, %v1022
    %v1024 = vld [vmem:[#allocation7] sm:$0xff]
    %v1025 = vld [vmem:[#allocation7 + $0x8] sm:$0xff]
    %v1026 = vld [vmem:[#allocation7 + $0x10] sm:$0xf]
    %v1027 = vld [vmem:[#allocation7 + $0x14] sm:$0xff]
    %v1028 = vld [vmem:[#allocation7 + $0x1c] sm:$0xff]
    %v1029 = vld [vmem:[#allocation7 + $0x24] sm:$0xf]
    %v1030 = vld [vmem:[#allocation7 + $0x28] sm:$0xff]
    %v1031 = vld [vmem:[#allocation7 + $0x30] sm:$0xff]
    %v1032 = vld [vmem:[#allocation7 + $0x38] sm:$0xf]
    %v1033 = vld [vmem:[#allocation7 + $0x3c] sm:$0xff]
    %v1034 = vld [vmem:[#allocation7 + $0x44] sm:$0xff]
    %v1035 = vld [vmem:[#allocation7 + $0x4c] sm:$0xf]
    %v1036 = vld [vmem:[#allocation7 + $0x50] sm:$0xff]
    %v1037 = vld [vmem:[#allocation7 + $0x58] sm:$0xff]
    %v1038 = vld [vmem:[#allocation7 + $0x60] sm:$0xf]
    %v1039 = vld [vmem:[#allocation7 + $0x64] sm:$0xff]
    %v1040 = vld [vmem:[#allocation7 + $0x6c] sm:$0xff]
    %v1041 = vld [vmem:[#allocation7 + $0x74] sm:$0xf]
    %v1042 = vld [vmem:[#allocation7 + $0x78] sm:$0xff]
    %v1043 = vld [vmem:[#allocation7 + $0x80] sm:$0xff]
    %v1044 = vld [vmem:[#allocation7 + $0x88] sm:$0xf]
    %v1045 = vld [vmem:[#allocation7 + $0x8c] sm:$0xff]
    %v1046 = vld [vmem:[#allocation7 + $0x94] sm:$0xff]
    %v1047 = vld [vmem:[#allocation7 + $0x9c] sm:$0xf]
    %v1048 = vld [vmem:[#allocation7 + $0xa0] sm:$0xff]
    %v1049 = vld [vmem:[#allocation7 + $0xa8] sm:$0xff]
    %v1050 = vld [vmem:[#allocation7 + $0xb0] sm:$0xf]
    %v1051 = vld [vmem:[#allocation7 + $0xb4] sm:$0xff]
    %v1052 = vld [vmem:[#allocation7 + $0xbc] sm:$0xff]
    %v1053 = vld [vmem:[#allocation7 + $0xc4] sm:$0xf]
    %v1054 = vld [vmem:[#allocation7 + $0xc8] sm:$0xff]
    %v1055 = vld [vmem:[#allocation7 + $0xd0] sm:$0xff]
    %v1056 = vld [vmem:[#allocation7 + $0xd8] sm:$0xf]
    %v1057 = vld [vmem:[#allocation7 + $0xdc] sm:$0xff]
    %v1058 = vld [vmem:[#allocation7 + $0xe4] sm:$0xff]
    %v1059 = vld [vmem:[#allocation7 + $0xec] sm:$0xf]
    %v1060 = vld [vmem:[#allocation7 + $0xf0] sm:$0xff]
    %v1061 = vld [vmem:[#allocation7 + $0xf8] sm:$0xff]
    %v1062 = vld [vmem:[#allocation7 + $0x100] sm:$0xf]
    %v1063 = vld [vmem:[#allocation7 + $0x104] sm:$0xff]
    %v1064 = vld [vmem:[#allocation7 + $0x10c] sm:$0xff]
    %v1065 = vld [vmem:[#allocation7 + $0x114] sm:$0xf]
    %v1066 = vld [vmem:[#allocation7 + $0x118] sm:$0xff]
    %v1067 = vld [vmem:[#allocation7 + $0x120] sm:$0xff]
    %v1068 = vld [vmem:[#allocation7 + $0x128] sm:$0xf]
    %v1069 = vld [vmem:[#allocation7 + $0x12c] sm:$0xff]
    %v1070 = vld [vmem:[#allocation7 + $0x134] sm:$0xff]
    %v1071 = vld [vmem:[#allocation7 + $0x13c] sm:$0xf]
    %v1072 = vpack.c.bf16 %v1023, %v1023
    %v1073 = vld [vmem:[%s5] sm:$0x1f]
    %v1075 = vlaneseq
    %v1076 = vshrl.u32 %v1075, 7
    %v1077 = vsub.s32 0, %v1076
    %v1078 = vrot.slane %v1073, %v1077
    %v1079 = vlaneseq
    %v1080 = vshrl.u32 %v1079, 7
    %v1081 = vsub.s32 1, %v1080
    %v1082 = vrot.slane %v1073, %v1081
    %v1083 = vlaneseq
    %v1084 = vshrl.u32 %v1083, 7
    %v1085 = vsub.s32 2, %v1084
    %v1086 = vrot.slane %v1073, %v1085
    %v1087 = vlaneseq
    %v1088 = vshrl.u32 %v1087, 7
    %v1089 = vsub.s32 3, %v1088
    %v1090 = vrot.slane %v1073, %v1089
    %v1091 = vlaneseq
    %v1092 = vshrl.u32 %v1091, 7
    %v1093 = vsub.s32 4, %v1092
    %v1094 = vrot.slane %v1073, %v1093
    %v1148 = vunpack.c.l.b16 %v1024
    %v1149 = vunpack.c.h.b16 %v1024
    %v1150 = vunpack.c.l.b16 %v1025
    %v1151 = vunpack.c.h.b16 %v1025
    %v1152 = vunpack.c.l.b16 %v1026
    %v1153 = vunpack.c.l.b16 %v1027
    %v1154 = vunpack.c.h.b16 %v1027
    %v1155 = vunpack.c.l.b16 %v1028
    %v1156 = vunpack.c.h.b16 %v1028
    %v1157 = vunpack.c.l.b16 %v1029
    %v1158 = vunpack.c.l.b16 %v1030
    %v1159 = vunpack.c.h.b16 %v1030
    %v1160 = vunpack.c.l.b16 %v1031
    %v1161 = vunpack.c.h.b16 %v1031
    %v1162 = vunpack.c.l.b16 %v1032
    %v1163 = vunpack.c.l.b16 %v1033
    %v1164 = vunpack.c.h.b16 %v1033
    %v1165 = vunpack.c.l.b16 %v1034
    %v1166 = vunpack.c.h.b16 %v1034
    %v1167 = vunpack.c.l.b16 %v1035
    %v1168 = vunpack.c.l.b16 %v1036
    %v1169 = vunpack.c.h.b16 %v1036
    %v1170 = vunpack.c.l.b16 %v1037
    %v1171 = vunpack.c.h.b16 %v1037
    %v1172 = vunpack.c.l.b16 %v1038
    %v1173 = vunpack.c.l.b16 %v1039
    %v1174 = vunpack.c.h.b16 %v1039
    %v1175 = vunpack.c.l.b16 %v1040
    %v1176 = vunpack.c.h.b16 %v1040
    %v1177 = vunpack.c.l.b16 %v1041
    %v1178 = vunpack.c.l.b16 %v1042
    %v1179 = vunpack.c.h.b16 %v1042
    %v1180 = vunpack.c.l.b16 %v1043
    %v1181 = vunpack.c.h.b16 %v1043
    %v1182 = vunpack.c.l.b16 %v1044
    %v1183 = vunpack.c.l.b16 %v1045
    %v1184 = vunpack.c.h.b16 %v1045
    %v1185 = vunpack.c.l.b16 %v1046
    %v1186 = vunpack.c.h.b16 %v1046
    %v1187 = vunpack.c.l.b16 %v1047
    %v1188 = vunpack.c.l.b16 %v1048
    %v1189 = vunpack.c.h.b16 %v1048
    %v1190 = vunpack.c.l.b16 %v1049
    %v1191 = vunpack.c.h.b16 %v1049
    %v1192 = vunpack.c.l.b16 %v1050
    %v1193 = vunpack.c.l.b16 %v1051
    %v1194 = vunpack.c.h.b16 %v1051
    %v1195 = vunpack.c.l.b16 %v1052
    %v1196 = vunpack.c.h.b16 %v1052
    %v1197 = vunpack.c.l.b16 %v1053
    %v1198 = vunpack.c.l.b16 %v1054
    %v1199 = vunpack.c.h.b16 %v1054
    %v1200 = vunpack.c.l.b16 %v1055
    %v1201 = vunpack.c.h.b16 %v1055
    %v1202 = vunpack.c.l.b16 %v1056
    %v1203 = vunpack.c.l.b16 %v1057
    %v1204 = vunpack.c.h.b16 %v1057
    %v1205 = vunpack.c.l.b16 %v1058
    %v1206 = vunpack.c.h.b16 %v1058
    %v1207 = vunpack.c.l.b16 %v1059
    %v1208 = vunpack.c.l.b16 %v1060
    %v1209 = vunpack.c.h.b16 %v1060
    %v1210 = vunpack.c.l.b16 %v1061
    %v1211 = vunpack.c.h.b16 %v1061
    %v1212 = vunpack.c.l.b16 %v1062
    %v1213 = vunpack.c.l.b16 %v1063
    %v1214 = vunpack.c.h.b16 %v1063
    %v1215 = vunpack.c.l.b16 %v1064
    %v1216 = vunpack.c.h.b16 %v1064
    %v1217 = vunpack.c.l.b16 %v1065
    %v1218 = vunpack.c.l.b16 %v1066
    %v1219 = vunpack.c.h.b16 %v1066
    %v1220 = vunpack.c.l.b16 %v1067
    %v1221 = vunpack.c.h.b16 %v1067
    %v1222 = vunpack.c.l.b16 %v1068
    %v1223 = vunpack.c.l.b16 %v1069
    %v1224 = vunpack.c.h.b16 %v1069
    %v1225 = vunpack.c.l.b16 %v1070
    %v1226 = vunpack.c.h.b16 %v1070
    %v1227 = vunpack.c.l.b16 %v1071
    %v1228 = vpack.c.b16 %v1153, %v1148
    %v1229 = vpack.c.b16 %v1154, %v1149
    %v1230 = vpack.c.b16 %v1155, %v1150
    %v1231 = vpack.c.b16 %v1156, %v1151
    %v1232 = vpack.c.b16 %v1157, %v1152
    %v1233 = vpack.c.b16 %v1163, %v1158
    %v1234 = vpack.c.b16 %v1164, %v1159
    %v1235 = vpack.c.b16 %v1165, %v1160
    %v1236 = vpack.c.b16 %v1166, %v1161
    %v1237 = vpack.c.b16 %v1167, %v1162
    %v1238 = vpack.c.b16 %v1173, %v1168
    %v1239 = vpack.c.b16 %v1174, %v1169
    %v1240 = vpack.c.b16 %v1175, %v1170
    %v1241 = vpack.c.b16 %v1176, %v1171
    %v1242 = vpack.c.b16 %v1177, %v1172
    %v1243 = vpack.c.b16 %v1183, %v1178
    %v1244 = vpack.c.b16 %v1184, %v1179
    %v1245 = vpack.c.b16 %v1185, %v1180
    %v1246 = vpack.c.b16 %v1186, %v1181
    %v1247 = vpack.c.b16 %v1187, %v1182
    %v1248 = vpack.c.b16 %v1193, %v1188
    %v1249 = vpack.c.b16 %v1194, %v1189
    %v1250 = vpack.c.b16 %v1195, %v1190
    %v1251 = vpack.c.b16 %v1196, %v1191
    %v1252 = vpack.c.b16 %v1197, %v1192
    %v1253 = vpack.c.b16 %v1203, %v1198
    %v1254 = vpack.c.b16 %v1204, %v1199
    %v1255 = vpack.c.b16 %v1205, %v1200
    %v1256 = vpack.c.b16 %v1206, %v1201
    %v1257 = vpack.c.b16 %v1207, %v1202
    %v1258 = vpack.c.b16 %v1213, %v1208
    %v1259 = vpack.c.b16 %v1214, %v1209
    %v1260 = vpack.c.b16 %v1215, %v1210
    %v1261 = vpack.c.b16 %v1216, %v1211
    %v1262 = vpack.c.b16 %v1217, %v1212
    %v1263 = vpack.c.b16 %v1223, %v1218
    %v1264 = vpack.c.b16 %v1224, %v1219
    %v1265 = vpack.c.b16 %v1225, %v1220
    %v1266 = vpack.c.b16 %v1226, %v1221
    %v1267 = vpack.c.b16 %v1227, %v1222
    %1308 = vmatprep.subr.bf16.mxu0 %v1229
    %1309 = vmatpush1.bf16.msra.mxu0 %v1228
    %1310 = vmatprep.subr.bf16.mxu0 %v1234
    %1311 = vmatpush1.bf16.msra.mxu0 %v1233
    %1312 = vmatprep.subr.bf16.mxu0 %v1239
    %1313 = vmatpush1.bf16.msra.mxu0 %v1238
    %1314 = vmatprep.subr.bf16.mxu0 %v1244
    %1315 = vmatpush1.bf16.msra.mxu0 %v1243
    %1316 = vmatprep.subr.bf16.mxu0 %v1249
    %1317 = vmatpush1.bf16.msra.mxu0 %v1248
    %1318 = vmatprep.subr.bf16.mxu0 %v1254
    %1319 = vmatpush1.bf16.msra.mxu0 %v1253
    %1320 = vmatprep.subr.bf16.mxu0 %v1259
    %1321 = vmatpush1.bf16.msra.mxu0 %v1258
    %1322 = vmatprep.subr.bf16.mxu0 %v1264
    %1323 = vmatpush1.bf16.msra.mxu0 %v1263
    %1324 = vmatprep.subr.bf16.mxu0 0
    %1325 = vmatpush1.bf16.msra.mxu0 0
    %1326 = vmatprep.subr.bf16.mxu0 0
    %1327 = vmatpush1.bf16.msra.mxu0 0
    %1328 = vmatprep.subr.bf16.mxu0 0
    %1329 = vmatpush1.bf16.msra.mxu0 0
    %1330 = vmatprep.subr.bf16.mxu0 0
    %1331 = vmatpush1.bf16.msra.mxu0 0
    %1332 = vmatprep.subr.bf16.mxu0 0
    %1333 = vmatpush1.bf16.msra.mxu0 0
    %1334 = vmatprep.subr.bf16.mxu0 0
    %1335 = vmatpush1.bf16.msra.mxu0 0
    %1336 = vmatprep.subr.bf16.mxu0 0
    %1337 = vmatpush1.bf16.msra.mxu0 0
    %1338 = vmatprep.subr.bf16.mxu0 0
    %1339 = vmatpush1.bf16.msra.mxu0 0
    %1340 = vmatprep.mubr.bf16.mxu0 0
    %1341 = vmatmul.mubr.bf16.gmra.mrb[0].mxu0 %v1072
    %v1342 = vpop.f32.mrb[0].mxu0
    %v1343 = vadd.f32 %v1078, %v1342
    %v1344 = vpop.f32.mrb[0].mxu0
    %v1345 = vadd.f32 %v1082, %v1344
    %v1346 = vpop.f32.mrb[0].mxu0
    %v1347 = vpop.f32.mrb[0].mxu0
    %1348 = vdwg.mxu0
    %1349 = vmatprep.subr.bf16.mxu0 %v1231
    %1350 = vmatpush1.bf16.msra.mxu0 %v1230
    %1351 = vmatprep.subr.bf16.mxu0 %v1236
    %1352 = vmatpush1.bf16.msra.mxu0 %v1235
    %1353 = vmatprep.subr.bf16.mxu0 %v1241
    %1354 = vmatpush1.bf16.msra.mxu0 %v1240
    %1355 = vmatprep.subr.bf16.mxu0 %v1246
    %1356 = vmatpush1.bf16.msra.mxu0 %v1245
    %1357 = vmatprep.subr.bf16.mxu0 %v1251
    %1358 = vmatpush1.bf16.msra.mxu0 %v1250
    %1359 = vmatprep.subr.bf16.mxu0 %v1256
    %1360 = vmatpush1.bf16.msra.mxu0 %v1255
    %1361 = vmatprep.subr.bf16.mxu0 %v1261
    %1362 = vmatpush1.bf16.msra.mxu0 %v1260
    %1363 = vmatprep.subr.bf16.mxu0 %v1266
    %1364 = vmatpush1.bf16.msra.mxu0 %v1265
    %1365 = vmatprep.subr.bf16.mxu0 0
    %1366 = vmatpush1.bf16.msra.mxu0 0
    %1367 = vmatprep.subr.bf16.mxu0 0
    %1368 = vmatpush1.bf16.msra.mxu0 0
    %1369 = vmatprep.subr.bf16.mxu0 0
    %1370 = vmatpush1.bf16.msra.mxu0 0
    %1371 = vmatprep.subr.bf16.mxu0 0
    %1372 = vmatpush1.bf16.msra.mxu0 0
    %1373 = vmatprep.subr.bf16.mxu0 0
    %1374 = vmatpush1.bf16.msra.mxu0 0
    %1375 = vmatprep.subr.bf16.mxu0 0
    %1376 = vmatpush1.bf16.msra.mxu0 0
    %1377 = vmatprep.subr.bf16.mxu0 0
    %1378 = vmatpush1.bf16.msra.mxu0 0
    %1379 = vmatprep.subr.bf16.mxu0 0
    %1380 = vmatpush1.bf16.msra.mxu0 0
    %1381 = vmatprep.mubr.bf16.mxu0 0
    %1382 = vmatmul.mubr.bf16.gmra.mrb[0].mxu0 %v1072
    %v1383 = vpop.f32.mrb[0].mxu0
    %v1384 = vadd.f32 %v1086, %v1383
    %v1385 = vpop.f32.mrb[0].mxu0
    %v1386 = vadd.f32 %v1090, %v1385
    %v1387 = vpop.f32.mrb[0].mxu0
    %v1388 = vpop.f32.mrb[0].mxu0
    %1389 = vdwg.mxu0
    %1390 = vmatprep.subr.bf16.mxu0 0
    %1391 = vmatpush1.bf16.msra.mxu0 %v1232
    %1392 = vmatprep.subr.bf16.mxu0 0
    %1393 = vmatpush1.bf16.msra.mxu0 %v1237
    %1394 = vmatprep.subr.bf16.mxu0 0
    %1395 = vmatpush1.bf16.msra.mxu0 %v1242
    %1396 = vmatprep.subr.bf16.mxu0 0
    %1397 = vmatpush1.bf16.msra.mxu0 %v1247
    %1398 = vmatprep.subr.bf16.mxu0 0
    %1399 = vmatpush1.bf16.msra.mxu0 %v1252
    %1400 = vmatprep.subr.bf16.mxu0 0
    %1401 = vmatpush1.bf16.msra.mxu0 %v1257
    %1402 = vmatprep.subr.bf16.mxu0 0
    %1403 = vmatpush1.bf16.msra.mxu0 %v1262
    %1404 = vmatprep.subr.bf16.mxu0 0
    %1405 = vmatpush1.bf16.msra.mxu0 %v1267
    %1406 = vmatprep.subr.bf16.mxu0 0
    %1407 = vmatpush1.bf16.msra.mxu0 0
    %1408 = vmatprep.subr.bf16.mxu0 0
    %1409 = vmatpush1.bf16.msra.mxu0 0
    %1410 = vmatprep.subr.bf16.mxu0 0
    %1411 = vmatpush1.bf16.msra.mxu0 0
    %1412 = vmatprep.subr.bf16.mxu0 0
    %1413 = vmatpush1.bf16.msra.mxu0 0
    %1414 = vmatprep.subr.bf16.mxu0 0
    %1415 = vmatpush1.bf16.msra.mxu0 0
    %1416 = vmatprep.subr.bf16.mxu0 0
    %1417 = vmatpush1.bf16.msra.mxu0 0
    %1418 = vmatprep.subr.bf16.mxu0 0
    %1419 = vmatpush1.bf16.msra.mxu0 0
    %1420 = vmatprep.subr.bf16.mxu0 0
    %1421 = vmatpush1.bf16.msra.mxu0 0
    %1422 = vmatprep.mubr.bf16.mxu0 0
    %1423 = vmatmul.mubr.bf16.gmra.mrb[0].mxu0 %v1072
    %v1424 = vpop.f32.mrb[0].mxu0
    %v1425 = vadd.f32 %v1094, %v1424
    %v1426 = vpop.f32.mrb[0].mxu0
    %v1427 = vpop.f32.mrb[0].mxu0
    %v1428 = vpop.f32.mrb[0].mxu0
    %1429 = vdwg.mxu0
    %v1430 = vmax.f32 %v1345, 0.0
    %v1431 = vmax.f32 %v1384, 0.0
    %v1432 = vmax.f32 %v1386, 0.0
    %v1433 = vmax.f32 %v1425, 0.0
    %v1434 = vld [vmem:[#allocation8] sm:$0xf]
    %v1435 = vld [vmem:[#allocation8 + $0x4] sm:$0xf]
    %v1436 = vld [vmem:[#allocation8 + $0x8] sm:$0xf]
    %v1437 = vld [vmem:[#allocation8 + $0xc] sm:$0xf]
    %v1438 = vld [vmem:[#allocation8 + $0x10] sm:$0xf]
    %v1439 = vld [vmem:[#allocation8 + $0x14] sm:$0xf]
    %v1440 = vld [vmem:[#allocation8 + $0x18] sm:$0xf]
    %v1441 = vld [vmem:[#allocation8 + $0x1c] sm:$0xf]
    %v1442 = vld [vmem:[#allocation8 + $0x20] sm:$0xf]
    %v1443 = vld [vmem:[#allocation8 + $0x24] sm:$0xf]
    %v1444 = vld [vmem:[#allocation8 + $0x28] sm:$0xf]
    %v1445 = vld [vmem:[#allocation8 + $0x2c] sm:$0xf]
    %v1446 = vld [vmem:[#allocation8 + $0x30] sm:$0xf]
    %v1447 = vld [vmem:[#allocation8 + $0x34] sm:$0xf]
    %v1448 = vld [vmem:[#allocation8 + $0x38] sm:$0xf]
    %v1449 = vld [vmem:[#allocation8 + $0x3c] sm:$0xf]
    %v1450 = vld [vmem:[#allocation8 + $0x40] sm:$0xf]
    %v1451 = vld [vmem:[#allocation8 + $0x44] sm:$0xf]
    %v1452 = vld [vmem:[#allocation8 + $0x48] sm:$0xf]
    %v1453 = vld [vmem:[#allocation8 + $0x4c] sm:$0xf]
    %v1454 = vld [vmem:[#allocation8 + $0x50] sm:$0xf]
    %v1455 = vld [vmem:[#allocation8 + $0x54] sm:$0xf]
    %v1456 = vld [vmem:[#allocation8 + $0x58] sm:$0xf]
    %v1457 = vld [vmem:[#allocation8 + $0x5c] sm:$0xf]
    %v1458 = vld [vmem:[#allocation8 + $0x60] sm:$0xf]
    %v1459 = vld [vmem:[#allocation8 + $0x64] sm:$0xf]
    %v1460 = vld [vmem:[#allocation8 + $0x68] sm:$0xf]
    %v1461 = vld [vmem:[#allocation8 + $0x6c] sm:$0xf]
    %v1462 = vld [vmem:[#allocation8 + $0x70] sm:$0xf]
    %v1463 = vld [vmem:[#allocation8 + $0x74] sm:$0xf]
    %v1464 = vld [vmem:[#allocation8 + $0x78] sm:$0xf]
    %v1465 = vld [vmem:[#allocation8 + $0x7c] sm:$0xf]
    %v1466 = vld [vmem:[#allocation8 + $0x80] sm:$0xf]
    %v1467 = vld [vmem:[#allocation8 + $0x84] sm:$0xf]
    %v1468 = vld [vmem:[#allocation8 + $0x88] sm:$0xf]
    %v1469 = vld [vmem:[#allocation8 + $0x8c] sm:$0xf]
    %v1470 = vld [vmem:[#allocation8 + $0x90] sm:$0xf]
    %v1471 = vld [vmem:[#allocation8 + $0x94] sm:$0xf]
    %v1472 = vld [vmem:[#allocation8 + $0x98] sm:$0xf]
    %v1473 = vld [vmem:[#allocation8 + $0x9c] sm:$0xf]
    %v1474 = vld [vmem:[#allocation8 + $0xa0] sm:$0xf]
    %v1475 = vld [vmem:[#allocation8 + $0xa4] sm:$0xf]
    %v1476 = vld [vmem:[#allocation8 + $0xa8] sm:$0xf]
    %v1477 = vld [vmem:[#allocation8 + $0xac] sm:$0xf]
    %v1478 = vld [vmem:[#allocation8 + $0xb0] sm:$0xf]
    %v1479 = vld [vmem:[#allocation8 + $0xb4] sm:$0xf]
    %v1480 = vld [vmem:[#allocation8 + $0xb8] sm:$0xf]
    %v1481 = vld [vmem:[#allocation8 + $0xbc] sm:$0xf]
    %v1482 = vld [vmem:[#allocation8 + $0xc0] sm:$0xf]
    %v1483 = vld [vmem:[#allocation8 + $0xc4] sm:$0xf]
    %v1484 = vld [vmem:[#allocation8 + $0xc8] sm:$0xf]
    %v1485 = vld [vmem:[#allocation8 + $0xcc] sm:$0xf]
    %v1486 = vld [vmem:[#allocation8 + $0xd0] sm:$0xf]
    %v1487 = vld [vmem:[#allocation8 + $0xd4] sm:$0xf]
    %v1488 = vld [vmem:[#allocation8 + $0xd8] sm:$0xf]
    %v1489 = vld [vmem:[#allocation8 + $0xdc] sm:$0xf]
    %v1490 = vld [vmem:[#allocation8 + $0xe0] sm:$0xf]
    %v1491 = vld [vmem:[#allocation8 + $0xe4] sm:$0xf]
    %v1492 = vld [vmem:[#allocation8 + $0xe8] sm:$0xf]
    %v1493 = vld [vmem:[#allocation8 + $0xec] sm:$0xf]
    %v1494 = vld [vmem:[#allocation8 + $0xf0] sm:$0xf]
    %v1495 = vld [vmem:[#allocation8 + $0xf4] sm:$0xf]
    %v1496 = vld [vmem:[#allocation8 + $0xf8] sm:$0xf]
    %v1497 = vld [vmem:[#allocation8 + $0xfc] sm:$0xf]
    %v1498 = vpack.c.bf16 %v1430, %v1430
    %v1499 = vpack.c.bf16 %v1431, %v1431
    %v1500 = vpack.c.bf16 %v1432, %v1432
    %v1501 = vpack.c.bf16 %v1433, %v1433
    %v1502 = vld [vmem:[#allocation10 + $0x8] sm:$0x1]
    %v1503 = vlaneseq
    %v1504 = vshrl.u32 %v1503, 7
    %v1505 = vsub.s32 0, %v1504
    %v1506 = vrot.slane %v1502, %v1505
    %v1571 = vunpack.c.l.b16 %v1434
    %v1572 = vunpack.c.l.b16 %v1435
    %v1573 = vunpack.c.l.b16 %v1436
    %v1574 = vunpack.c.l.b16 %v1437
    %v1575 = vunpack.c.l.b16 %v1438
    %v1576 = vunpack.c.l.b16 %v1439
    %v1577 = vunpack.c.l.b16 %v1440
    %v1578 = vunpack.c.l.b16 %v1441
    %v1579 = vunpack.c.l.b16 %v1442
    %v1580 = vunpack.c.l.b16 %v1443
    %v1581 = vunpack.c.l.b16 %v1444
    %v1582 = vunpack.c.l.b16 %v1445
    %v1583 = vunpack.c.l.b16 %v1446
    %v1584 = vunpack.c.l.b16 %v1447
    %v1585 = vunpack.c.l.b16 %v1448
    %v1586 = vunpack.c.l.b16 %v1449
    %v1587 = vunpack.c.l.b16 %v1450
    %v1588 = vunpack.c.l.b16 %v1451
    %v1589 = vunpack.c.l.b16 %v1452
    %v1590 = vunpack.c.l.b16 %v1453
    %v1591 = vunpack.c.l.b16 %v1454
    %v1592 = vunpack.c.l.b16 %v1455
    %v1593 = vunpack.c.l.b16 %v1456
    %v1594 = vunpack.c.l.b16 %v1457
    %v1595 = vunpack.c.l.b16 %v1458
    %v1596 = vunpack.c.l.b16 %v1459
    %v1597 = vunpack.c.l.b16 %v1460
    %v1598 = vunpack.c.l.b16 %v1461
    %v1599 = vunpack.c.l.b16 %v1462
    %v1600 = vunpack.c.l.b16 %v1463
    %v1601 = vunpack.c.l.b16 %v1464
    %v1602 = vunpack.c.l.b16 %v1465
    %v1603 = vunpack.c.l.b16 %v1466
    %v1604 = vunpack.c.l.b16 %v1467
    %v1605 = vunpack.c.l.b16 %v1468
    %v1606 = vunpack.c.l.b16 %v1469
    %v1607 = vunpack.c.l.b16 %v1470
    %v1608 = vunpack.c.l.b16 %v1471
    %v1609 = vunpack.c.l.b16 %v1472
    %v1610 = vunpack.c.l.b16 %v1473
    %v1611 = vunpack.c.l.b16 %v1474
    %v1612 = vunpack.c.l.b16 %v1475
    %v1613 = vunpack.c.l.b16 %v1476
    %v1614 = vunpack.c.l.b16 %v1477
    %v1615 = vunpack.c.l.b16 %v1478
    %v1616 = vunpack.c.l.b16 %v1479
    %v1617 = vunpack.c.l.b16 %v1480
    %v1618 = vunpack.c.l.b16 %v1481
    %v1619 = vunpack.c.l.b16 %v1482
    %v1620 = vunpack.c.l.b16 %v1483
    %v1621 = vunpack.c.l.b16 %v1484
    %v1622 = vunpack.c.l.b16 %v1485
    %v1623 = vunpack.c.l.b16 %v1486
    %v1624 = vunpack.c.l.b16 %v1487
    %v1625 = vunpack.c.l.b16 %v1488
    %v1626 = vunpack.c.l.b16 %v1489
    %v1627 = vunpack.c.l.b16 %v1490
    %v1628 = vunpack.c.l.b16 %v1491
    %v1629 = vunpack.c.l.b16 %v1492
    %v1630 = vunpack.c.l.b16 %v1493
    %v1631 = vunpack.c.l.b16 %v1494
    %v1632 = vunpack.c.l.b16 %v1495
    %v1633 = vunpack.c.l.b16 %v1496
    %v1634 = vunpack.c.l.b16 %v1497
    %v1635 = vpack.c.b16 %v1572, %v1571
    %v1636 = vpack.c.b16 %v1574, %v1573
    %v1637 = vpack.c.b16 %v1576, %v1575
    %v1638 = vpack.c.b16 %v1578, %v1577
    %v1639 = vpack.c.b16 %v1580, %v1579
    %v1640 = vpack.c.b16 %v1582, %v1581
    %v1641 = vpack.c.b16 %v1584, %v1583
    %v1642 = vpack.c.b16 %v1586, %v1585
    %v1643 = vpack.c.b16 %v1588, %v1587
    %v1644 = vpack.c.b16 %v1590, %v1589
    %v1645 = vpack.c.b16 %v1592, %v1591
    %v1646 = vpack.c.b16 %v1594, %v1593
    %v1647 = vpack.c.b16 %v1596, %v1595
    %v1648 = vpack.c.b16 %v1598, %v1597
    %v1649 = vpack.c.b16 %v1600, %v1599
    %v1650 = vpack.c.b16 %v1602, %v1601
    %v1651 = vpack.c.b16 %v1604, %v1603
    %v1652 = vpack.c.b16 %v1606, %v1605
    %v1653 = vpack.c.b16 %v1608, %v1607
    %v1654 = vpack.c.b16 %v1610, %v1609
    %v1655 = vpack.c.b16 %v1612, %v1611
    %v1656 = vpack.c.b16 %v1614, %v1613
    %v1657 = vpack.c.b16 %v1616, %v1615
    %v1658 = vpack.c.b16 %v1618, %v1617
    %v1659 = vpack.c.b16 %v1620, %v1619
    %v1660 = vpack.c.b16 %v1622, %v1621
    %v1661 = vpack.c.b16 %v1624, %v1623
    %v1662 = vpack.c.b16 %v1626, %v1625
    %v1663 = vpack.c.b16 %v1628, %v1627
    %v1664 = vpack.c.b16 %v1630, %v1629
    %v1665 = vpack.c.b16 %v1632, %v1631
    %v1666 = vpack.c.b16 %v1634, %v1633
    %1699 = vmatprep.subr.bf16.mxu0 0
    %1700 = vmatpush1.bf16.msra.mxu0 %v1635
    %1701 = vmatprep.subr.bf16.mxu0 0
    %1702 = vmatpush1.bf16.msra.mxu0 %v1636
    %1703 = vmatprep.subr.bf16.mxu0 0
    %1704 = vmatpush1.bf16.msra.mxu0 %v1637
    %1705 = vmatprep.subr.bf16.mxu0 0
    %1706 = vmatpush1.bf16.msra.mxu0 %v1638
    %1707 = vmatprep.subr.bf16.mxu0 0
    %1708 = vmatpush1.bf16.msra.mxu0 %v1639
    %1709 = vmatprep.subr.bf16.mxu0 0
    %1710 = vmatpush1.bf16.msra.mxu0 %v1640
    %1711 = vmatprep.subr.bf16.mxu0 0
    %1712 = vmatpush1.bf16.msra.mxu0 %v1641
    %1713 = vmatprep.subr.bf16.mxu0 0
    %1714 = vmatpush1.bf16.msra.mxu0 %v1642
    %1715 = vmatprep.subr.bf16.mxu0 0
    %1716 = vmatpush1.bf16.msra.mxu0 %v1643
    %1717 = vmatprep.subr.bf16.mxu0 0
    %1718 = vmatpush1.bf16.msra.mxu0 %v1644
    %1719 = vmatprep.subr.bf16.mxu0 0
    %1720 = vmatpush1.bf16.msra.mxu0 %v1645
    %1721 = vmatprep.subr.bf16.mxu0 0
    %1722 = vmatpush1.bf16.msra.mxu0 %v1646
    %1723 = vmatprep.subr.bf16.mxu0 0
    %1724 = vmatpush1.bf16.msra.mxu0 %v1647
    %1725 = vmatprep.subr.bf16.mxu0 0
    %1726 = vmatpush1.bf16.msra.mxu0 %v1648
    %1727 = vmatprep.subr.bf16.mxu0 0
    %1728 = vmatpush1.bf16.msra.mxu0 %v1649
    %1729 = vmatprep.subr.bf16.mxu0 0
    %1730 = vmatpush1.bf16.msra.mxu0 %v1650
    %1731 = vmatprep.mubr.bf16.mxu0 %v1499
    %1732 = vmatmul.mubr.bf16.gmra.mrb[0].mxu0 %v1498
    %v1733 = vpop.f32.mrb[0].mxu0
    %v1734 = vadd.f32 %v1506, %v1733
    %v1735 = vpop.f32.mrb[0].mxu0
    %v1736 = vpop.f32.mrb[0].mxu0
    %v1737 = vpop.f32.mrb[0].mxu0
    %1738 = vdwg.mxu0
    %1739 = vmatprep.subr.bf16.mxu0 0
    %1740 = vmatpush1.bf16.msra.mxu0 %v1651
    %1741 = vmatprep.subr.bf16.mxu0 0
    %1742 = vmatpush1.bf16.msra.mxu0 %v1652
    %1743 = vmatprep.subr.bf16.mxu0 0
    %1744 = vmatpush1.bf16.msra.mxu0 %v1653
    %1745 = vmatprep.subr.bf16.mxu0 0
    %1746 = vmatpush1.bf16.msra.mxu0 %v1654
    %1747 = vmatprep.subr.bf16.mxu0 0
    %1748 = vmatpush1.bf16.msra.mxu0 %v1655
    %1749 = vmatprep.subr.bf16.mxu0 0
    %1750 = vmatpush1.bf16.msra.mxu0 %v1656
    %1751 = vmatprep.subr.bf16.mxu0 0
    %1752 = vmatpush1.bf16.msra.mxu0 %v1657
    %1753 = vmatprep.subr.bf16.mxu0 0
    %1754 = vmatpush1.bf16.msra.mxu0 %v1658
    %1755 = vmatprep.subr.bf16.mxu0 0
    %1756 = vmatpush1.bf16.msra.mxu0 %v1659
    %1757 = vmatprep.subr.bf16.mxu0 0
    %1758 = vmatpush1.bf16.msra.mxu0 %v1660
    %1759 = vmatprep.subr.bf16.mxu0 0
    %1760 = vmatpush1.bf16.msra.mxu0 %v1661
    %1761 = vmatprep.subr.bf16.mxu0 0
    %1762 = vmatpush1.bf16.msra.mxu0 %v1662
    %1763 = vmatprep.subr.bf16.mxu0 0
    %1764 = vmatpush1.bf16.msra.mxu0 %v1663
    %1765 = vmatprep.subr.bf16.mxu0 0
    %1766 = vmatpush1.bf16.msra.mxu0 %v1664
    %1767 = vmatprep.subr.bf16.mxu0 0
    %1768 = vmatpush1.bf16.msra.mxu0 %v1665
    %1769 = vmatprep.subr.bf16.mxu0 0
    %1770 = vmatpush1.bf16.msra.mxu0 %v1666
    %1771 = vmatprep.mubr.bf16.mxu0 %v1501
    %1772 = vmatmul.mubr.bf16.gmra.mrb[0].mxu0 %v1500
    %v1773 = vpop.f32.mrb[0].mxu0
    %v1774 = vadd.f32 %v1734, %v1773
    %v1775 = vpop.f32.mrb[0].mxu0
    %v1776 = vpop.f32.mrb[0].mxu0
    %v1777 = vpop.f32.mrb[0].mxu0
    %1778 = vdwg.mxu0
    %vm1779 = vcmp.lt.s32.totalorder %v98, 4
    %v1780 = vsel %vm1779, %v1343, -1e+30
    %1781 = vmax.xlane.f32.xlu0 %v1780
    %v1782 = vpop.xlane.xlu0 %1781
    %v1783 = vsub.f32 %v1780, %v1782
    %v1784 = vmul.f32 %v1783, 1.442695
    %v1785 = vpow.pop %v1784
    %1786 = vadd.xlane.f32.xlu0 %v1785
    %v1787 = vpop.xlane.xlu0 %1786
    %v1788 = vrcp.pop %v1787
    %v1789 = vmul.f32 %v1785, %v1788
    %v1790 = vmul.f32 %v1789, %v1774
    %1791 = vadd.xlane.f32.xlu0 %v1790
    %v1792 = vpop.xlane.xlu0 %1791
    %vm1793 = vcmp.lt.s32.totalorder %v98, 19
    %vm1794 = vmand %vm778, %vm1793
    %v1795 = vsel %vm1794, %v1343, -1e+30
    %1796 = vmax.xlane.f32.xlu0 %v1795
    %v1797 = vpop.xlane.xlu0 %1796
    %v1798 = vsub.f32 %v1795, %v1797
    %v1799 = vmul.f32 %v1798, 1.442695
    %v1800 = vpow.pop %v1799
    %1801 = vadd.xlane.f32.xlu0 %v1800
    %v1802 = vpop.xlane.xlu0 %1801
    %v1803 = vrcp.pop %v1802
    %v1804 = vmul.f32 %v1800, %v1803
    %v1805 = vsub.s32 %v98, 16
    %v1806 = vadd.s32 %v1805, 1
    %v1807 = vcvt.s32.f32 %v1806
    %v1808 = vmul.f32 %v1807, 0.5
    %v1809 = vsel %vm1794, %v1808, 0.0
    %v1810 = vmul.f32 %v1804, %v1809
    %1811 = vadd.xlane.f32.xlu0 %v1810
    %v1812 = vpop.xlane.xlu0 %1811
    %vm1813 = vcmp.eq.s32.totalorder %v98, 24
    %v1814 = vtanh.pop %v1343
    %v1815 = vsel %vm1813, %v1814, 0.0
    %1816 = vadd.xlane.f32.xlu0 %v1815
    %v1817 = vpop.xlane.xlu0 %1816
    %v1818 = vmul.f32 %v1792, %v1812
    %v1819 = vadd.f32 %v1818, %v1817
    %vm1820 = vcmask 7168
    %1821 = vst.msk [vmem:[%s6] sm:$0xff] %vm1820, %v1819
    %vm1822 = vcmp.ge.s32.totalorder %v98, 4
    %vm1823 = vcmp.lt.s32.totalorder %v98, 8
    %vm1824 = vmand %vm1822, %vm1823
    %v1825 = vsel %vm1824, %v1343, -1e+30
    %1826 = vmax.xlane.f32.xlu0 %v1825
    %v1827 = vpop.xlane.xlu0 %1826
    %vm1828 = vcmp.ge.f32.partialorder %v1825, %v1827
    %vm1829 = vmand %vm1824, %vm1828
    %v1830 = vsel %vm1829, %v98, 128
    %v1831 = vand.u32 %v1830, 65535
    %v1832 = vshra.s32 %v1830, 16
    %v1833 = vcvt.s32.f32 %v1831
    %v1834 = vcvt.s32.f32 %v1832
    %1835 = vmin.xlane.f32.xlu0 %v1834
    %v1836 = vpop.xlane.xlu0 %1835
    %vm1837 = vcmp.eq.f32.partialorder %v1834, %v1836
    %v1838 = vsel %vm1837, %v1833, inf
    %1839 = vmin.xlane.f32.xlu0 %v1838
    %v1840 = vpop.xlane.xlu0 %1839
    %v1841 = vcvt.f32.s32 %v1840
    %v1842 = vcvt.f32.s32 %v1836
    %v1843 = vshll.u32 %v1842, 16
    %v1844 = vadd.s32 %v1843, %v1841
    %v1845 = vsub.s32 %v1844, 4
    %1846 = vst.msk [vmem:[%s7] sm:$0xff] %vm1820, %v1845
    // Predicated region
    $region46: #{world_model_rl.1} parent=1 // pred_check
      _
    $region47: #{world_model_rl.1} parent=1 // pred_check_branch
      %1848 = sbr.rel (0) target = $region49
    $region48: #{world_model_rl.1} parent=1 // pred_region
      _
    $region49: #{world_model_rl.1} parent=1 // pred_fallthru
      _
    // Predicated region
    $region50: #{world_model_rl.1} parent=1 // pred_check
      _
    $region51: #{world_model_rl.1} parent=1 // pred_check_branch
      %1850 = sbr.rel (0) target = $region53
    $region52: #{world_model_rl.1} parent=1 // pred_region
      _
    $region53: #{world_model_rl.1} parent=1 // pred_fallthru
      _
    // Predicated region
    $region54: #{world_model_rl.1} parent=1 // pred_check
      _
    $region55: #{world_model_rl.1} parent=1 // pred_check_branch
      %1852 = sbr.rel (0) target = $region57
    $region56: #{world_model_rl.1} parent=1 // pred_region
      _
    $region57: #{world_model_rl.1} parent=1 // pred_fallthru
      _
    // Predicated region
    $region58: #{world_model_rl.1} parent=1 // pred_check
      _
    $region59: #{world_model_rl.1} parent=1 // pred_check_branch
      %1854 = sbr.rel (0) target = $region61
    $region60: #{world_model_rl.1} parent=1 // pred_region
      _
    $region61: #{world_model_rl.1} parent=1 // pred_fallthru
      _
    %1855 = vsyncpa [#allocation4], 1
    %1856 = vsyncpa [#allocation6], 1
    %1857 = vsyncpa [#allocation9], 1

</llo_original>
